<compile_context>
chip_gen: v5e
topology: v5e:2x2
jax: 0.10.0
libtpu: 0.0.40
codegen_flags: <defaults>
</compile_context>

<pallas_src>
import functools

import jax
import jax.numpy as jnp
from jax.experimental import pallas as pl
from jax.experimental.pallas import tpu as pltpu


def _silu_kernel(x):
    # sigmoid(x) = 0.5*(1 + tanh(0.5*x)): single EUP op + VALU, instead of
    # exp + divide.  Mathematically identical to x*sigmoid(x).
    return x * (0.5 * jnp.tanh(0.5 * x) + 0.5)


def _silu_ref(x):
    return x * jax.nn.sigmoid(x)


# ----------------------------------------------------------------------------
# Fused CSPAM kernel (one batch image per grid step)
# ----------------------------------------------------------------------------
def cspam_kernel(H, W, hid,
                 x_ref,
                 aw1t_ref, ab1_ref, aw2t_ref, ab2_ref,
                 w12_ref, b12_ref,
                 wm1_ref, bm1_ref, wm2_ref, bm2_ref,
                 w3a_ref, w3b_ref, b3_ref,
                 o_ref):
    """Activations are (channels, H*W): channels on sublanes, pixels on lanes."""
    f32, bf16 = jnp.float32, jnp.bfloat16
    HW = H * W
    x = x_ref[0]                                             # (C, HW) f32

    # --- CSAM: global avg pool -> 1x1+SiLU -> 1x1+SiLU -> channel scale -----
    mean = jnp.mean(x, axis=1, keepdims=True)                # (C, 1)
    # first 1x1 on the pooled vector: broadcast-mul + sublane reduce (VPU/XLU)
    h = _silu_kernel(jnp.sum(aw1t_ref[...] * mean, axis=0, keepdims=True)
                     + ab1_ref[...])                         # (1, C)
    s = _silu_kernel(jnp.dot(h.astype(bf16), aw2t_ref[...],
                             preferred_element_type=f32) + ab2_ref[...])  # (1, C)

    # --- two parallel 1x1 branches fused into ONE M=2*hid matmul -------------
    # Channel scale folded into the stacked weight: (x*s) @ W == x @ (W*s).
    w12s = (w12_ref[...] * s).astype(bf16)                   # (2*hid, C)
    x12 = _silu_kernel(jnp.dot(w12s, x.astype(bf16),
                               preferred_element_type=f32) + b12_ref[...])
    x1 = x12[:hid]                                           # split is sublane
    x2 = x12[hid:]                                           # aligned (hid%8==0)

    # --- per-tap validity masks, hoisted once, shared by both 3x3 convs ------
    pix = jax.lax.broadcasted_iota(jnp.int32, (1, HW), 1)    # flat pixel index
    col = pix % W
    left_ok, right_ok = col >= 1, col <= W - 2
    top_ok, bot_ok = pix >= W, pix < HW - W
    masks = []
    for dy in range(3):
        for dx in range(3):
            m = None
            if dy == 0:
                m = top_ok
            elif dy == 2:
                m = bot_ok
            if dx == 0:
                m = left_ok if m is None else m & left_ok
            elif dx == 2:
                m = right_ok if m is None else m & right_ok
            masks.append(m)                                  # None == center tap

    def conv3x3(a, w_ref, b_ref):
        # a: (Cin, HW) f32; w_ref: (9, Cout, Cin) bf16 (tap = dy*3+dx);
        # b_ref: (Cout, 1) f32.  9 accumulating dots, no im2col buffer.
        cout = w_ref.shape[1]
        acc = jnp.zeros((cout, HW), f32)
        for dy in range(3):
            for dx in range(3):
                tap = dy * 3 + dx
                off = (dy - 1) * W + (dx - 1)
                # out[:, p] = a[:, p + off] (wrap), then mask out-of-image taps
                t = a if off == 0 else pltpu.roll(a, shift=(-off) % HW, axis=1)
                if masks[tap] is not None:
                    t = jnp.where(masks[tap], t, 0.0)
                acc = acc + jnp.dot(w_ref[tap], t.astype(bf16),
                                    preferred_element_type=f32)
        return _silu_kernel(acc + b_ref[...])

    # --- Bottleneck (n=1, shortcut=True, e=1.0): 3x3 -> 3x3 + residual -------
    t = conv3x3(x1, wm1_ref, bm1_ref)
    x1 = x1 + conv3x3(t, wm2_ref, bm2_ref)

    # --- concat-free final 1x1: W3 split over the two concat halves ----------
    y = jnp.dot(w3a_ref[...], x1.astype(bf16), preferred_element_type=f32)
    y = y + jnp.dot(w3b_ref[...], x2.astype(bf16), preferred_element_type=f32)
    o_ref[0] = _silu_kernel(y + b3_ref[...])


# ----------------------------------------------------------------------------
# pallas_call wrapper
# ----------------------------------------------------------------------------
def cspam_forward_pallas(x, params, H, W):
    """x: (B, C, H*W) float32 (NCHW with flattened spatial) -> (B, Cout, H*W)."""
    B, C, HW = x.shape
    bf16 = jnp.bfloat16
    hid = params["w_conv1"].shape[0]
    Cout = params["w_conv3a"].shape[0]

    # One-time host/XLA-side weight prep (amortized over the batch):
    #   * stack the two branch 1x1 convs so the kernel runs one M=2*hid matmul
    #   * pre-cast every image-invariant matmul weight to bf16 (w_conv1/2 stay
    #     f32 because the per-image CSAM scale is folded into them in-kernel)
    w12 = jnp.concatenate([params["w_conv1"], params["w_conv2"]], axis=0)
    b12 = jnp.concatenate([params["b_conv1"], params["b_conv2"]], axis=0)
    weights = (
        params["csam_w1t"], params["csam_b1"],
        params["csam_w2t"].astype(bf16), params["csam_b2"],
        w12, b12,
        params["w_m_cv1"].astype(bf16), params["b_m_cv1"],
        params["w_m_cv2"].astype(bf16), params["b_m_cv2"],
        params["w_conv3a"].astype(bf16), params["w_conv3b"].astype(bf16),
        params["b_conv3"],
    )

    def whole(a):   # full-array block, constant index across the batch grid
        if a.ndim == 3:
            return pl.BlockSpec(a.shape, lambda b: (0, 0, 0))
        return pl.BlockSpec(a.shape, lambda b: (0, 0))

    return pl.pallas_call(
        functools.partial(cspam_kernel, H, W, hid),
        out_shape=jax.ShapeDtypeStruct((B, Cout, HW), x.dtype),
        grid=(B,),
        in_specs=[pl.BlockSpec((1, C, HW), lambda b: (b, 0, 0))]
                 + [whole(w) for w in weights],
        out_specs=pl.BlockSpec((1, Cout, HW), lambda b: (b, 0, 0)),
        # Batch axis is independent -> megacore sharding on v7x.  Raise the
        # scoped VMEM cap above the 16/32 MiB defaults (re-derive strip sizes
        # for production shapes; keep <~48 MiB working set on v7x).
        compiler_params=pltpu.CompilerParams(
            dimension_semantics=("parallel",),
            vmem_limit_bytes=64 * 1024 * 1024),
    )(x, *weights)


# ----------------------------------------------------------------------------
# Pure-JAX reference: same PyTorch CSPAM math (BN folded), same bf16-operand /
# f32-accumulate matmul numerics, but an independent spatial formulation
# (explicit 2-D zero padding, standard sigmoid) as a cross-check.
# ----------------------------------------------------------------------------
def cspam_forward_ref(x, p, H, W):
    f32, bf16 = jnp.float32, jnp.bfloat16
    B, C, HW = x.shape

    def mm(w, a):                       # (o,c) x (B,c,p) -> (B,o,p)
        return jnp.einsum("oc,bcp->bop", w.astype(bf16), a.astype(bf16),
                          preferred_element_type=f32)

    # CSAM
    mean = jnp.mean(x, axis=2, keepdims=True)                       # (B, C, 1)
    h = _silu_ref(jnp.sum(p["csam_w1t"][None] * mean, axis=1, keepdims=True)
                  + p["csam_b1"])                                   # (B, 1, C)
    s = _silu_ref(jnp.einsum("bic,co->bio", h.astype(bf16),
                             p["csam_w2t"].astype(bf16),
                             preferred_element_type=f32) + p["csam_b2"])

    w1s = p["w_conv1"][None] * s                                    # (B, hid, C)
    w2s = p["w_conv2"][None] * s
    x1 = _silu_ref(jnp.einsum("boc,bcp->bop", w1s.astype(bf16), x.astype(bf16),
                              preferred_element_type=f32) + p["b_conv1"])
    x2 = _silu_ref(jnp.einsum("boc,bcp->bop", w2s.astype(bf16), x.astype(bf16),
                              preferred_element_type=f32) + p["b_conv2"])

    def conv3x3(a, w, b):
        cin, cout = a.shape[1], w.shape[1]
        ap = jnp.pad(a.reshape(B, cin, H, W), ((0, 0), (0, 0), (1, 1), (1, 1)))
        acc = jnp.zeros((B, cout, H, W), f32)
        for dy in range(3):
            for dx in range(3):
                acc = acc + jnp.einsum(
                    "oc,bchw->bohw",
                    w[dy * 3 + dx].astype(bf16),
                    ap[:, :, dy:dy + H, dx:dx + W].astype(bf16),
                    preferred_element_type=f32)
        return _silu_ref(acc + b.reshape(1, cout, 1, 1)).reshape(B, cout, HW)

    t = conv3x3(x1, p["w_m_cv1"], p["b_m_cv1"])
    x1 = x1 + conv3x3(t, p["w_m_cv2"], p["b_m_cv2"])

    y = mm(p["w_conv3a"], x1) + mm(p["w_conv3b"], x2) + p["b_conv3"]
    return _silu_ref(y)


# ----------------------------------------------------------------------------
# Deterministic parameter construction (Conv weight + folded BatchNorm)
# ----------------------------------------------------------------------------
def init_baseconv(key, cin, cout, k):
    """Returns BN-folded (weight, bias).
    weight: (cout, cin) for k=1, (9, cout, cin) tap-major (tap=ky*3+kx) for k=3;
    bias:   (cout, 1)."""
    kw, kg, kb, km, kv = jax.random.split(key, 5)
    w = jax.random.normal(kw, (cout, cin, k, k), jnp.float32)
    w = w / jnp.sqrt(jnp.float32(cin * k * k))
    gamma = 1.0 + 0.1 * jax.random.normal(kg, (cout,), jnp.float32)
    beta = 0.1 * jax.random.normal(kb, (cout,), jnp.float32)
    mean = 0.1 * jax.random.normal(km, (cout,), jnp.float32)
    var = 0.5 + 0.5 * jnp.abs(jax.random.normal(kv, (cout,), jnp.float32))
    eps = 1e-3                      # BatchNorm2d(eps=0.001), eval mode
    scale = gamma / jnp.sqrt(var + eps)
    w_f = w * scale[:, None, None, None]
    b_f = (beta - mean * scale).reshape(cout, 1)
    if k == 1:
        w_f = w_f[:, :, 0, 0]                                   # (cout, cin)
    else:
        # (cout, cin, ky, kx) -> (ky, kx, cout, cin) -> (9, cout, cin)
        w_f = jnp.transpose(w_f, (2, 3, 0, 1)).reshape(k * k, cout, cin)
    return w_f, b_f


def build_params(key, cin, cout, expansion=0.5):
    hid = int(cout * expansion)
    keys = jax.random.split(key, 7)
    p = {}
    w, b = init_baseconv(keys[0], cin, cin, 1)
    p["csam_w1t"], p["csam_b1"] = w.T, b.T                      # (cin,cin), (1,cin)
    w, b = init_baseconv(keys[1], cin, cin, 1)
    p["csam_w2t"], p["csam_b2"] = w.T, b.T
    p["w_conv1"], p["b_conv1"] = init_baseconv(keys[2], cin, hid, 1)
    p["w_conv2"], p["b_conv2"] = init_baseconv(keys[3], cin, hid, 1)
    p["w_m_cv1"], p["b_m_cv1"] = init_baseconv(keys[4], hid, hid, 3)
    p["w_m_cv2"], p["b_m_cv2"] = init_baseconv(keys[5], hid, hid, 3)
    w3, p["b_conv3"] = init_baseconv(keys[6], 2 * hid, cout, 1)
    # split the final 1x1 weight over the two concat halves (x1 first, x2 second)
    p["w_conv3a"], p["w_conv3b"] = w3[:, :hid], w3[:, hid:]
    return p


# ----------------------------------------------------------------------------
if __name__ == "__main__":
    B, Cin, H, W = 2, 16, 16, 16
    Cout = 16                       # expansion=0.5 -> hidden channels = 8

    root = jax.random.PRNGKey(0)
    kx, kp = jax.random.split(root)
    # PyTorch-equivalent NCHW input; channels-first is already the lane-dense
    # layout the kernel wants, so only a free reshape is needed.
    x_nchw = jax.random.normal(kx, (B, Cin, H, W), jnp.float32)
    x_flat = x_nchw.reshape(B, Cin, H * W)

    params = build_params(kp, Cin, Cout)

    out = cspam_forward_pallas(x_flat, params, H, W)
    out = jax.block_until_ready(out)
    out_nchw = out.reshape(B, Cout, H, W)

    ref = cspam_forward_ref(x_flat, params, H, W).reshape(B, Cout, H, W)
    err = float(jnp.max(jnp.abs(out_nchw - ref)))
    assert out_nchw.shape == (B, Cout, H, W)
    assert err < 1e-2, f"mismatch vs reference: max abs err = {err}"

    print("KERNEL_OK")
</pallas_src>

<mosaic_0001>
module attributes {stable_mosaic.version = 11 : i64} {
  func.func @cspam_kernel(%arg0: i32, %arg1: memref<1x16x256xf32, #tpu.memory_space<vmem>>, %arg2: memref<16x16xf32, #tpu.memory_space<vmem>>, %arg3: memref<1x16xf32, #tpu.memory_space<vmem>>, %arg4: memref<16x16xbf16, #tpu.memory_space<vmem>>, %arg5: memref<1x16xf32, #tpu.memory_space<vmem>>, %arg6: memref<16x16xf32, #tpu.memory_space<vmem>>, %arg7: memref<16x1xf32, #tpu.memory_space<vmem>>, %arg8: memref<9x8x8xbf16, #tpu.memory_space<vmem>>, %arg9: memref<8x1xf32, #tpu.memory_space<vmem>>, %arg10: memref<9x8x8xbf16, #tpu.memory_space<vmem>>, %arg11: memref<8x1xf32, #tpu.memory_space<vmem>>, %arg12: memref<16x8xbf16, #tpu.memory_space<vmem>>, %arg13: memref<16x8xbf16, #tpu.memory_space<vmem>>, %arg14: memref<16x1xf32, #tpu.memory_space<vmem>>, %arg15: memref<1x16x256xf32, #tpu.memory_space<vmem>>) attributes {dimension_semantics = [#tpu.dimension_semantics<parallel>], iteration_bounds = array<i64: 2>, scalar_prefetch = 0 : i64, scratch_operands = 0 : i64, tpu.core_type = #tpu.core_type<tc>, window_params = [{transform_indices = @transform_0, window_bounds = array<i64: 1, 16, 256>}, {pipeline_mode = #tpu.pipeline_mode<synchronous>, transform_indices = @transform_1, window_bounds = array<i64: 16, 16>}, {pipeline_mode = #tpu.pipeline_mode<synchronous>, transform_indices = @transform_2, window_bounds = array<i64: 1, 16>}, {pipeline_mode = #tpu.pipeline_mode<synchronous>, transform_indices = @transform_3, window_bounds = array<i64: 16, 16>}, {pipeline_mode = #tpu.pipeline_mode<synchronous>, transform_indices = @transform_4, window_bounds = array<i64: 1, 16>}, {pipeline_mode = #tpu.pipeline_mode<synchronous>, transform_indices = @transform_5, window_bounds = array<i64: 16, 16>}, {pipeline_mode = #tpu.pipeline_mode<synchronous>, transform_indices = @transform_6, window_bounds = array<i64: 16, 1>}, {pipeline_mode = #tpu.pipeline_mode<synchronous>, transform_indices = @transform_7, window_bounds = array<i64: 9, 8, 8>}, {pipeline_mode = #tpu.pipeline_mode<synchronous>, transform_indices = @transform_8, window_bounds = array<i64: 8, 1>}, {pipeline_mode = #tpu.pipeline_mode<synchronous>, transform_indices = @transform_9, window_bounds = array<i64: 9, 8, 8>}, {pipeline_mode = #tpu.pipeline_mode<synchronous>, transform_indices = @transform_10, window_bounds = array<i64: 8, 1>}, {pipeline_mode = #tpu.pipeline_mode<synchronous>, transform_indices = @transform_11, window_bounds = array<i64: 16, 8>}, {pipeline_mode = #tpu.pipeline_mode<synchronous>, transform_indices = @transform_12, window_bounds = array<i64: 16, 8>}, {pipeline_mode = #tpu.pipeline_mode<synchronous>, transform_indices = @transform_13, window_bounds = array<i64: 16, 1>}, {transform_indices = @transform_14, window_bounds = array<i64: 1, 16, 256>}]} {
    %c0 = arith.constant 0 : index
    %c0_0 = arith.constant 0 : index
    %c0_1 = arith.constant 0 : index
    %0 = vector.load %arg1[%c0, %c0_0, %c0_1] : memref<1x16x256xf32, #tpu.memory_space<vmem>>, vector<1x16x256xf32>
    %1 = vector.shape_cast %0 : vector<1x16x256xf32> to vector<16x256xf32>
    %cst = arith.constant dense<0.000000e+00> : vector<16xf32>
    %2 = vector.multi_reduction <add>, %1, %cst [1] : vector<16x256xf32> to vector<16xf32>
    %3 = vector.shape_cast %2 : vector<16xf32> to vector<16x1xf32>
    %cst_2 = arith.constant 2.560000e+02 : f32
    %4 = vector.broadcast %cst_2 : f32 to vector<16x1xf32>
    %5 = arith.divf %3, %4 : vector<16x1xf32>
    %c0_3 = arith.constant 0 : index
    %c0_4 = arith.constant 0 : index
    %6 = vector.load %arg2[%c0_3, %c0_4] : memref<16x16xf32, #tpu.memory_space<vmem>>, vector<16x16xf32>
    %7 = vector.broadcast %5 : vector<16x1xf32> to vector<16x16xf32>
    %8 = arith.mulf %6, %7 : vector<16x16xf32>
    %cst_5 = arith.constant dense<0.000000e+00> : vector<16xf32>
    %9 = vector.multi_reduction <add>, %8, %cst_5 [0] : vector<16x16xf32> to vector<16xf32>
    %10 = vector.shape_cast %9 : vector<16xf32> to vector<1x16xf32>
    %c0_6 = arith.constant 0 : index
    %c0_7 = arith.constant 0 : index
    %11 = vector.load %arg3[%c0_6, %c0_7] : memref<1x16xf32, #tpu.memory_space<vmem>>, vector<1x16xf32>
    %12 = arith.addf %10, %11 : vector<1x16xf32>
    %cst_8 = arith.constant 5.000000e-01 : f32
    %13 = vector.broadcast %cst_8 : f32 to vector<1x16xf32>
    %14 = arith.mulf %13, %12 : vector<1x16xf32>
    %15 = math.tanh %14 : vector<1x16xf32>
    %cst_9 = arith.constant 5.000000e-01 : f32
    %16 = vector.broadcast %cst_9 : f32 to vector<1x16xf32>
    %17 = arith.mulf %16, %15 : vector<1x16xf32>
    %cst_10 = arith.constant 5.000000e-01 : f32
    %18 = vector.broadcast %cst_10 : f32 to vector<1x16xf32>
    %19 = arith.addf %17, %18 : vector<1x16xf32>
    %20 = arith.mulf %12, %19 : vector<1x16xf32>
    %21 = arith.truncf %20 : vector<1x16xf32> to vector<1x16xbf16>
    %c0_11 = arith.constant 0 : index
    %c0_12 = arith.constant 0 : index
    %22 = vector.load %arg4[%c0_11, %c0_12] : memref<16x16xbf16, #tpu.memory_space<vmem>>, vector<16x16xbf16>
    %cst_13 = arith.constant dense<0.000000e+00> : vector<1x16xf32>
    %23 = tpu.matmul %21, %22, %cst_13 {dimension_numbers = #tpu.dot_dimension_numbers<[1], [0], [0], [1], [0, 0, 1, 1], [], []>} : vector<1x16xbf16>, vector<16x16xbf16>, vector<1x16xf32> -> vector<1x16xf32>
    %c0_14 = arith.constant 0 : index
    %c0_15 = arith.constant 0 : index
    %24 = vector.load %arg5[%c0_14, %c0_15] : memref<1x16xf32, #tpu.memory_space<vmem>>, vector<1x16xf32>
    %25 = arith.addf %23, %24 : vector<1x16xf32>
    %cst_16 = arith.constant 5.000000e-01 : f32
    %26 = vector.broadcast %cst_16 : f32 to vector<1x16xf32>
    %27 = arith.mulf %26, %25 : vector<1x16xf32>
    %28 = math.tanh %27 : vector<1x16xf32>
    %cst_17 = arith.constant 5.000000e-01 : f32
    %29 = vector.broadcast %cst_17 : f32 to vector<1x16xf32>
    %30 = arith.mulf %29, %28 : vector<1x16xf32>
    %cst_18 = arith.constant 5.000000e-01 : f32
    %31 = vector.broadcast %cst_18 : f32 to vector<1x16xf32>
    %32 = arith.addf %30, %31 : vector<1x16xf32>
    %33 = arith.mulf %25, %32 : vector<1x16xf32>
    %c0_19 = arith.constant 0 : index
    %c0_20 = arith.constant 0 : index
    %34 = vector.load %arg6[%c0_19, %c0_20] : memref<16x16xf32, #tpu.memory_space<vmem>>, vector<16x16xf32>
    %35 = vector.broadcast %33 : vector<1x16xf32> to vector<16x16xf32>
    %36 = arith.mulf %34, %35 : vector<16x16xf32>
    %37 = arith.truncf %36 : vector<16x16xf32> to vector<16x16xbf16>
    %38 = arith.truncf %1 : vector<16x256xf32> to vector<16x256xbf16>
    %cst_21 = arith.constant dense<0.000000e+00> : vector<16x256xf32>
    %39 = tpu.matmul %37, %38, %cst_21 {dimension_numbers = #tpu.dot_dimension_numbers<[1], [0], [0], [1], [0, 0, 1, 1], [], []>} : vector<16x16xbf16>, vector<16x256xbf16>, vector<16x256xf32> -> vector<16x256xf32>
    %c0_22 = arith.constant 0 : index
    %c0_23 = arith.constant 0 : index
    %40 = vector.load %arg7[%c0_22, %c0_23] : memref<16x1xf32, #tpu.memory_space<vmem>>, vector<16x1xf32>
    %41 = vector.broadcast %40 : vector<16x1xf32> to vector<16x256xf32>
    %42 = arith.addf %39, %41 : vector<16x256xf32>
    %cst_24 = arith.constant 5.000000e-01 : f32
    %43 = vector.broadcast %cst_24 : f32 to vector<16x256xf32>
    %44 = arith.mulf %43, %42 : vector<16x256xf32>
    %45 = math.tanh %44 : vector<16x256xf32>
    %cst_25 = arith.constant 5.000000e-01 : f32
    %46 = vector.broadcast %cst_25 : f32 to vector<16x256xf32>
    %47 = arith.mulf %46, %45 : vector<16x256xf32>
    %cst_26 = arith.constant 5.000000e-01 : f32
    %48 = vector.broadcast %cst_26 : f32 to vector<16x256xf32>
    %49 = arith.addf %47, %48 : vector<16x256xf32>
    %50 = arith.mulf %42, %49 : vector<16x256xf32>
    %51 = vector.extract_strided_slice %50 {offsets = [0, 0], sizes = [8, 256], strides = [1, 1]} : vector<16x256xf32> to vector<8x256xf32>
    %52 = vector.extract_strided_slice %50 {offsets = [8, 0], sizes = [8, 256], strides = [1, 1]} : vector<16x256xf32> to vector<8x256xf32>
    %53 = tpu.iota {dimensions = array<i32: 1>} : vector<1x256xi32>
    %c16_i32 = arith.constant 16 : i32
    %c0_i32 = arith.constant 0 : i32
    %54 = arith.cmpi eq, %c16_i32, %c0_i32 : i32
    %c1_i32 = arith.constant 1 : i32
    %55 = arith.select %54, %c1_i32, %c16_i32 : i32
    %56 = vector.broadcast %55 : i32 to vector<1x256xi32>
    %57 = arith.remsi %53, %56 : vector<1x256xi32>
    %c0_i32_27 = arith.constant 0 : i32
    %58 = vector.broadcast %c0_i32_27 : i32 to vector<1x256xi32>
    %59 = arith.cmpi ne, %57, %58 : vector<1x256xi32>
    %c0_i32_28 = arith.constant 0 : i32
    %60 = vector.broadcast %c0_i32_28 : i32 to vector<1x256xi32>
    %61 = arith.cmpi slt, %57, %60 : vector<1x256xi32>
    %c0_i32_29 = arith.constant 0 : i32
    %62 = arith.cmpi slt, %55, %c0_i32_29 : i32
    %63 = vector.broadcast %62 : i1 to vector<1x256xi1>
    %64 = vector.broadcast %63 : vector<1x256xi1> to vector<1x256xi1>
    %65 = arith.xori %61, %64 : vector<1x256xi1>
    %66 = arith.andi %65, %59 : vector<1x256xi1>
    %67 = vector.broadcast %55 : i32 to vector<1x256xi32>
    %68 = arith.addi %57, %67 : vector<1x256xi32>
    %69 = arith.select %66, %68, %57 : vector<1x256xi1>, vector<1x256xi32>
    %c1_i32_30 = arith.constant 1 : i32
    %70 = vector.broadcast %c1_i32_30 : i32 to vector<1x256xi32>
    %71 = arith.cmpi sge, %69, %70 : vector<1x256xi32>
    %c14_i32 = arith.constant 14 : i32
    %72 = vector.broadcast %c14_i32 : i32 to vector<1x256xi32>
    %73 = arith.cmpi sle, %69, %72 : vector<1x256xi32>
    %c16_i32_31 = arith.constant 16 : i32
    %74 = vector.broadcast %c16_i32_31 : i32 to vector<1x256xi32>
    %75 = arith.cmpi sge, %53, %74 : vector<1x256xi32>
    %c240_i32 = arith.constant 240 : i32
    %76 = vector.broadcast %c240_i32 : i32 to vector<1x256xi32>
    %77 = arith.cmpi slt, %53, %76 : vector<1x256xi32>
    %78 = arith.andi %75, %71 : vector<1x256xi1>
    %79 = arith.andi %75, %73 : vector<1x256xi1>
    %80 = arith.andi %77, %71 : vector<1x256xi1>
    %81 = arith.andi %77, %73 : vector<1x256xi1>
    %cst_32 = arith.constant 0.000000e+00 : f32
    %82 = vector.broadcast %cst_32 : f32 to vector<8x256xf32>
    %c17_i32 = arith.constant 17 : i32
    %83 = tpu.dynamic_rotate %51 by %c17_i32 dim 1 : vector<8x256xf32>, i32 -> vector<8x256xf32>
    %cst_33 = arith.constant 0.000000e+00 : f32
    %84 = vector.shape_cast %78 : vector<1x256xi1> to vector<1x256xi1>
    %85 = vector.broadcast %84 : vector<1x256xi1> to vector<8x256xi1>
    %86 = vector.broadcast %cst_33 : f32 to vector<8x256xf32>
    %87 = arith.select %85, %83, %86 : vector<8x256xi1>, vector<8x256xf32>
    %c0_34 = arith.constant 0 : index
    %c0_35 = arith.constant 0 : index
    %c0_36 = arith.constant 0 : index
    %88 = vector.load %arg8[%c0_34, %c0_35, %c0_36] : memref<9x8x8xbf16, #tpu.memory_space<vmem>>, vector<1x8x8xbf16>
    %89 = vector.shape_cast %88 : vector<1x8x8xbf16> to vector<8x8xbf16>
    %90 = arith.truncf %87 : vector<8x256xf32> to vector<8x256xbf16>
    %cst_37 = arith.constant dense<0.000000e+00> : vector<8x256xf32>
    %91 = tpu.matmul %89, %90, %cst_37 {dimension_numbers = #tpu.dot_dimension_numbers<[1], [0], [0], [1], [0, 0, 1, 1], [], []>} : vector<8x8xbf16>, vector<8x256xbf16>, vector<8x256xf32> -> vector<8x256xf32>
    %92 = arith.addf %82, %91 : vector<8x256xf32>
    %c16_i32_38 = arith.constant 16 : i32
    %93 = tpu.dynamic_rotate %51 by %c16_i32_38 dim 1 : vector<8x256xf32>, i32 -> vector<8x256xf32>
    %cst_39 = arith.constant 0.000000e+00 : f32
    %94 = vector.shape_cast %75 : vector<1x256xi1> to vector<1x256xi1>
    %95 = vector.broadcast %94 : vector<1x256xi1> to vector<8x256xi1>
    %96 = vector.broadcast %cst_39 : f32 to vector<8x256xf32>
    %97 = arith.select %95, %93, %96 : vector<8x256xi1>, vector<8x256xf32>
    %c1 = arith.constant 1 : index
    %c0_40 = arith.constant 0 : index
    %c0_41 = arith.constant 0 : index
    %98 = vector.load %arg8[%c1, %c0_40, %c0_41] : memref<9x8x8xbf16, #tpu.memory_space<vmem>>, vector<1x8x8xbf16>
    %99 = vector.shape_cast %98 : vector<1x8x8xbf16> to vector<8x8xbf16>
    %100 = arith.truncf %97 : vector<8x256xf32> to vector<8x256xbf16>
    %cst_42 = arith.constant dense<0.000000e+00> : vector<8x256xf32>
    %101 = tpu.matmul %99, %100, %cst_42 {dimension_numbers = #tpu.dot_dimension_numbers<[1], [0], [0], [1], [0, 0, 1, 1], [], []>} : vector<8x8xbf16>, vector<8x256xbf16>, vector<8x256xf32> -> vector<8x256xf32>
    %102 = arith.addf %92, %101 : vector<8x256xf32>
    %c15_i32 = arith.constant 15 : i32
    %103 = tpu.dynamic_rotate %51 by %c15_i32 dim 1 : vector<8x256xf32>, i32 -> vector<8x256xf32>
    %cst_43 = arith.constant 0.000000e+00 : f32
    %104 = vector.shape_cast %79 : vector<1x256xi1> to vector<1x256xi1>
    %105 = vector.broadcast %104 : vector<1x256xi1> to vector<8x256xi1>
    %106 = vector.broadcast %cst_43 : f32 to vector<8x256xf32>
    %107 = arith.select %105, %103, %106 : vector<8x256xi1>, vector<8x256xf32>
    %c2 = arith.constant 2 : index
    %c0_44 = arith.constant 0 : index
    %c0_45 = arith.constant 0 : index
    %108 = vector.load %arg8[%c2, %c0_44, %c0_45] : memref<9x8x8xbf16, #tpu.memory_space<vmem>>, vector<1x8x8xbf16>
    %109 = vector.shape_cast %108 : vector<1x8x8xbf16> to vector<8x8xbf16>
    %110 = arith.truncf %107 : vector<8x256xf32> to vector<8x256xbf16>
    %cst_46 = arith.constant dense<0.000000e+00> : vector<8x256xf32>
    %111 = tpu.matmul %109, %110, %cst_46 {dimension_numbers = #tpu.dot_dimension_numbers<[1], [0], [0], [1], [0, 0, 1, 1], [], []>} : vector<8x8xbf16>, vector<8x256xbf16>, vector<8x256xf32> -> vector<8x256xf32>
    %112 = arith.addf %102, %111 : vector<8x256xf32>
    %c1_i32_47 = arith.constant 1 : i32
    %113 = tpu.dynamic_rotate %51 by %c1_i32_47 dim 1 : vector<8x256xf32>, i32 -> vector<8x256xf32>
    %cst_48 = arith.constant 0.000000e+00 : f32
    %114 = vector.shape_cast %71 : vector<1x256xi1> to vector<1x256xi1>
    %115 = vector.broadcast %114 : vector<1x256xi1> to vector<8x256xi1>
    %116 = vector.broadcast %cst_48 : f32 to vector<8x256xf32>
    %117 = arith.select %115, %113, %116 : vector<8x256xi1>, vector<8x256xf32>
    %c3 = arith.constant 3 : index
    %c0_49 = arith.constant 0 : index
    %c0_50 = arith.constant 0 : index
    %118 = vector.load %arg8[%c3, %c0_49, %c0_50] : memref<9x8x8xbf16, #tpu.memory_space<vmem>>, vector<1x8x8xbf16>
    %119 = vector.shape_cast %118 : vector<1x8x8xbf16> to vector<8x8xbf16>
    %120 = arith.truncf %117 : vector<8x256xf32> to vector<8x256xbf16>
    %cst_51 = arith.constant dense<0.000000e+00> : vector<8x256xf32>
    %121 = tpu.matmul %119, %120, %cst_51 {dimension_numbers = #tpu.dot_dimension_numbers<[1], [0], [0], [1], [0, 0, 1, 1], [], []>} : vector<8x8xbf16>, vector<8x256xbf16>, vector<8x256xf32> -> vector<8x256xf32>
    %122 = arith.addf %112, %121 : vector<8x256xf32>
    %c4 = arith.constant 4 : index
    %c0_52 = arith.constant 0 : index
    %c0_53 = arith.constant 0 : index
    %123 = vector.load %arg8[%c4, %c0_52, %c0_53] : memref<9x8x8xbf16, #tpu.memory_space<vmem>>, vector<1x8x8xbf16>
    %124 = vector.shape_cast %123 : vector<1x8x8xbf16> to vector<8x8xbf16>
    %125 = arith.truncf %51 : vector<8x256xf32> to vector<8x256xbf16>
    %cst_54 = arith.constant dense<0.000000e+00> : vector<8x256xf32>
    %126 = tpu.matmul %124, %125, %cst_54 {dimension_numbers = #tpu.dot_dimension_numbers<[1], [0], [0], [1], [0, 0, 1, 1], [], []>} : vector<8x8xbf16>, vector<8x256xbf16>, vector<8x256xf32> -> vector<8x256xf32>
    %127 = arith.addf %122, %126 : vector<8x256xf32>
    %c255_i32 = arith.constant 255 : i32
    %128 = tpu.dynamic_rotate %51 by %c255_i32 dim 1 : vector<8x256xf32>, i32 -> vector<8x256xf32>
    %cst_55 = arith.constant 0.000000e+00 : f32
    %129 = vector.shape_cast %73 : vector<1x256xi1> to vector<1x256xi1>
    %130 = vector.broadcast %129 : vector<1x256xi1> to vector<8x256xi1>
    %131 = vector.broadcast %cst_55 : f32 to vector<8x256xf32>
    %132 = arith.select %130, %128, %131 : vector<8x256xi1>, vector<8x256xf32>
    %c5 = arith.constant 5 : index
    %c0_56 = arith.constant 0 : index
    %c0_57 = arith.constant 0 : index
    %133 = vector.load %arg8[%c5, %c0_56, %c0_57] : memref<9x8x8xbf16, #tpu.memory_space<vmem>>, vector<1x8x8xbf16>
    %134 = vector.shape_cast %133 : vector<1x8x8xbf16> to vector<8x8xbf16>
    %135 = arith.truncf %132 : vector<8x256xf32> to vector<8x256xbf16>
    %cst_58 = arith.constant dense<0.000000e+00> : vector<8x256xf32>
    %136 = tpu.matmul %134, %135, %cst_58 {dimension_numbers = #tpu.dot_dimension_numbers<[1], [0], [0], [1], [0, 0, 1, 1], [], []>} : vector<8x8xbf16>, vector<8x256xbf16>, vector<8x256xf32> -> vector<8x256xf32>
    %137 = arith.addf %127, %136 : vector<8x256xf32>
    %c241_i32 = arith.constant 241 : i32
    %138 = tpu.dynamic_rotate %51 by %c241_i32 dim 1 : vector<8x256xf32>, i32 -> vector<8x256xf32>
    %cst_59 = arith.constant 0.000000e+00 : f32
    %139 = vector.shape_cast %80 : vector<1x256xi1> to vector<1x256xi1>
    %140 = vector.broadcast %139 : vector<1x256xi1> to vector<8x256xi1>
    %141 = vector.broadcast %cst_59 : f32 to vector<8x256xf32>
    %142 = arith.select %140, %138, %141 : vector<8x256xi1>, vector<8x256xf32>
    %c6 = arith.constant 6 : index
    %c0_60 = arith.constant 0 : index
    %c0_61 = arith.constant 0 : index
    %143 = vector.load %arg8[%c6, %c0_60, %c0_61] : memref<9x8x8xbf16, #tpu.memory_space<vmem>>, vector<1x8x8xbf16>
    %144 = vector.shape_cast %143 : vector<1x8x8xbf16> to vector<8x8xbf16>
    %145 = arith.truncf %142 : vector<8x256xf32> to vector<8x256xbf16>
    %cst_62 = arith.constant dense<0.000000e+00> : vector<8x256xf32>
    %146 = tpu.matmul %144, %145, %cst_62 {dimension_numbers = #tpu.dot_dimension_numbers<[1], [0], [0], [1], [0, 0, 1, 1], [], []>} : vector<8x8xbf16>, vector<8x256xbf16>, vector<8x256xf32> -> vector<8x256xf32>
    %147 = arith.addf %137, %146 : vector<8x256xf32>
    %c240_i32_63 = arith.constant 240 : i32
    %148 = tpu.dynamic_rotate %51 by %c240_i32_63 dim 1 : vector<8x256xf32>, i32 -> vector<8x256xf32>
    %cst_64 = arith.constant 0.000000e+00 : f32
    %149 = vector.shape_cast %77 : vector<1x256xi1> to vector<1x256xi1>
    %150 = vector.broadcast %149 : vector<1x256xi1> to vector<8x256xi1>
    %151 = vector.broadcast %cst_64 : f32 to vector<8x256xf32>
    %152 = arith.select %150, %148, %151 : vector<8x256xi1>, vector<8x256xf32>
    %c7 = arith.constant 7 : index
    %c0_65 = arith.constant 0 : index
    %c0_66 = arith.constant 0 : index
    %153 = vector.load %arg8[%c7, %c0_65, %c0_66] : memref<9x8x8xbf16, #tpu.memory_space<vmem>>, vector<1x8x8xbf16>
    %154 = vector.shape_cast %153 : vector<1x8x8xbf16> to vector<8x8xbf16>
    %155 = arith.truncf %152 : vector<8x256xf32> to vector<8x256xbf16>
    %cst_67 = arith.constant dense<0.000000e+00> : vector<8x256xf32>
    %156 = tpu.matmul %154, %155, %cst_67 {dimension_numbers = #tpu.dot_dimension_numbers<[1], [0], [0], [1], [0, 0, 1, 1], [], []>} : vector<8x8xbf16>, vector<8x256xbf16>, vector<8x256xf32> -> vector<8x256xf32>
    %157 = arith.addf %147, %156 : vector<8x256xf32>
    %c239_i32 = arith.constant 239 : i32
    %158 = tpu.dynamic_rotate %51 by %c239_i32 dim 1 : vector<8x256xf32>, i32 -> vector<8x256xf32>
    %cst_68 = arith.constant 0.000000e+00 : f32
    %159 = vector.shape_cast %81 : vector<1x256xi1> to vector<1x256xi1>
    %160 = vector.broadcast %159 : vector<1x256xi1> to vector<8x256xi1>
    %161 = vector.broadcast %cst_68 : f32 to vector<8x256xf32>
    %162 = arith.select %160, %158, %161 : vector<8x256xi1>, vector<8x256xf32>
    %c8 = arith.constant 8 : index
    %c0_69 = arith.constant 0 : index
    %c0_70 = arith.constant 0 : index
    %163 = vector.load %arg8[%c8, %c0_69, %c0_70] : memref<9x8x8xbf16, #tpu.memory_space<vmem>>, vector<1x8x8xbf16>
    %164 = vector.shape_cast %163 : vector<1x8x8xbf16> to vector<8x8xbf16>
    %165 = arith.truncf %162 : vector<8x256xf32> to vector<8x256xbf16>
    %cst_71 = arith.constant dense<0.000000e+00> : vector<8x256xf32>
    %166 = tpu.matmul %164, %165, %cst_71 {dimension_numbers = #tpu.dot_dimension_numbers<[1], [0], [0], [1], [0, 0, 1, 1], [], []>} : vector<8x8xbf16>, vector<8x256xbf16>, vector<8x256xf32> -> vector<8x256xf32>
    %167 = arith.addf %157, %166 : vector<8x256xf32>
    %c0_72 = arith.constant 0 : index
    %c0_73 = arith.constant 0 : index
    %168 = vector.load %arg9[%c0_72, %c0_73] : memref<8x1xf32, #tpu.memory_space<vmem>>, vector<8x1xf32>
    %169 = vector.broadcast %168 : vector<8x1xf32> to vector<8x256xf32>
    %170 = arith.addf %167, %169 : vector<8x256xf32>
    %cst_74 = arith.constant 5.000000e-01 : f32
    %171 = vector.broadcast %cst_74 : f32 to vector<8x256xf32>
    %172 = arith.mulf %171, %170 : vector<8x256xf32>
    %173 = math.tanh %172 : vector<8x256xf32>
    %cst_75 = arith.constant 5.000000e-01 : f32
    %174 = vector.broadcast %cst_75 : f32 to vector<8x256xf32>
    %175 = arith.mulf %174, %173 : vector<8x256xf32>
    %cst_76 = arith.constant 5.000000e-01 : f32
    %176 = vector.broadcast %cst_76 : f32 to vector<8x256xf32>
    %177 = arith.addf %175, %176 : vector<8x256xf32>
    %178 = arith.mulf %170, %177 : vector<8x256xf32>
    %cst_77 = arith.constant 0.000000e+00 : f32
    %179 = vector.broadcast %cst_77 : f32 to vector<8x256xf32>
    %c17_i32_78 = arith.constant 17 : i32
    %180 = tpu.dynamic_rotate %178 by %c17_i32_78 dim 1 : vector<8x256xf32>, i32 -> vector<8x256xf32>
    %cst_79 = arith.constant 0.000000e+00 : f32
    %181 = vector.shape_cast %78 : vector<1x256xi1> to vector<1x256xi1>
    %182 = vector.broadcast %181 : vector<1x256xi1> to vector<8x256xi1>
    %183 = vector.broadcast %cst_79 : f32 to vector<8x256xf32>
    %184 = arith.select %182, %180, %183 : vector<8x256xi1>, vector<8x256xf32>
    %c0_80 = arith.constant 0 : index
    %c0_81 = arith.constant 0 : index
    %c0_82 = arith.constant 0 : index
    %185 = vector.load %arg10[%c0_80, %c0_81, %c0_82] : memref<9x8x8xbf16, #tpu.memory_space<vmem>>, vector<1x8x8xbf16>
    %186 = vector.shape_cast %185 : vector<1x8x8xbf16> to vector<8x8xbf16>
    %187 = arith.truncf %184 : vector<8x256xf32> to vector<8x256xbf16>
    %cst_83 = arith.constant dense<0.000000e+00> : vector<8x256xf32>
    %188 = tpu.matmul %186, %187, %cst_83 {dimension_numbers = #tpu.dot_dimension_numbers<[1], [0], [0], [1], [0, 0, 1, 1], [], []>} : vector<8x8xbf16>, vector<8x256xbf16>, vector<8x256xf32> -> vector<8x256xf32>
    %189 = arith.addf %179, %188 : vector<8x256xf32>
    %c16_i32_84 = arith.constant 16 : i32
    %190 = tpu.dynamic_rotate %178 by %c16_i32_84 dim 1 : vector<8x256xf32>, i32 -> vector<8x256xf32>
    %cst_85 = arith.constant 0.000000e+00 : f32
    %191 = vector.shape_cast %75 : vector<1x256xi1> to vector<1x256xi1>
    %192 = vector.broadcast %191 : vector<1x256xi1> to vector<8x256xi1>
    %193 = vector.broadcast %cst_85 : f32 to vector<8x256xf32>
    %194 = arith.select %192, %190, %193 : vector<8x256xi1>, vector<8x256xf32>
    %c1_86 = arith.constant 1 : index
    %c0_87 = arith.constant 0 : index
    %c0_88 = arith.constant 0 : index
    %195 = vector.load %arg10[%c1_86, %c0_87, %c0_88] : memref<9x8x8xbf16, #tpu.memory_space<vmem>>, vector<1x8x8xbf16>
    %196 = vector.shape_cast %195 : vector<1x8x8xbf16> to vector<8x8xbf16>
    %197 = arith.truncf %194 : vector<8x256xf32> to vector<8x256xbf16>
    %cst_89 = arith.constant dense<0.000000e+00> : vector<8x256xf32>
    %198 = tpu.matmul %196, %197, %cst_89 {dimension_numbers = #tpu.dot_dimension_numbers<[1], [0], [0], [1], [0, 0, 1, 1], [], []>} : vector<8x8xbf16>, vector<8x256xbf16>, vector<8x256xf32> -> vector<8x256xf32>
    %199 = arith.addf %189, %198 : vector<8x256xf32>
    %c15_i32_90 = arith.constant 15 : i32
    %200 = tpu.dynamic_rotate %178 by %c15_i32_90 dim 1 : vector<8x256xf32>, i32 -> vector<8x256xf32>
    %cst_91 = arith.constant 0.000000e+00 : f32
    %201 = vector.shape_cast %79 : vector<1x256xi1> to vector<1x256xi1>
    %202 = vector.broadcast %201 : vector<1x256xi1> to vector<8x256xi1>
    %203 = vector.broadcast %cst_91 : f32 to vector<8x256xf32>
    %204 = arith.select %202, %200, %203 : vector<8x256xi1>, vector<8x256xf32>
    %c2_92 = arith.constant 2 : index
    %c0_93 = arith.constant 0 : index
    %c0_94 = arith.constant 0 : index
    %205 = vector.load %arg10[%c2_92, %c0_93, %c0_94] : memref<9x8x8xbf16, #tpu.memory_space<vmem>>, vector<1x8x8xbf16>
    %206 = vector.shape_cast %205 : vector<1x8x8xbf16> to vector<8x8xbf16>
    %207 = arith.truncf %204 : vector<8x256xf32> to vector<8x256xbf16>
    %cst_95 = arith.constant dense<0.000000e+00> : vector<8x256xf32>
    %208 = tpu.matmul %206, %207, %cst_95 {dimension_numbers = #tpu.dot_dimension_numbers<[1], [0], [0], [1], [0, 0, 1, 1], [], []>} : vector<8x8xbf16>, vector<8x256xbf16>, vector<8x256xf32> -> vector<8x256xf32>
    %209 = arith.addf %199, %208 : vector<8x256xf32>
    %c1_i32_96 = arith.constant 1 : i32
    %210 = tpu.dynamic_rotate %178 by %c1_i32_96 dim 1 : vector<8x256xf32>, i32 -> vector<8x256xf32>
    %cst_97 = arith.constant 0.000000e+00 : f32
    %211 = vector.shape_cast %71 : vector<1x256xi1> to vector<1x256xi1>
    %212 = vector.broadcast %211 : vector<1x256xi1> to vector<8x256xi1>
    %213 = vector.broadcast %cst_97 : f32 to vector<8x256xf32>
    %214 = arith.select %212, %210, %213 : vector<8x256xi1>, vector<8x256xf32>
    %c3_98 = arith.constant 3 : index
    %c0_99 = arith.constant 0 : index
    %c0_100 = arith.constant 0 : index
    %215 = vector.load %arg10[%c3_98, %c0_99, %c0_100] : memref<9x8x8xbf16, #tpu.memory_space<vmem>>, vector<1x8x8xbf16>
    %216 = vector.shape_cast %215 : vector<1x8x8xbf16> to vector<8x8xbf16>
    %217 = arith.truncf %214 : vector<8x256xf32> to vector<8x256xbf16>
    %cst_101 = arith.constant dense<0.000000e+00> : vector<8x256xf32>
    %218 = tpu.matmul %216, %217, %cst_101 {dimension_numbers = #tpu.dot_dimension_numbers<[1], [0], [0], [1], [0, 0, 1, 1], [], []>} : vector<8x8xbf16>, vector<8x256xbf16>, vector<8x256xf32> -> vector<8x256xf32>
    %219 = arith.addf %209, %218 : vector<8x256xf32>
    %c4_102 = arith.constant 4 : index
    %c0_103 = arith.constant 0 : index
    %c0_104 = arith.constant 0 : index
    %220 = vector.load %arg10[%c4_102, %c0_103, %c0_104] : memref<9x8x8xbf16, #tpu.memory_space<vmem>>, vector<1x8x8xbf16>
    %221 = vector.shape_cast %220 : vector<1x8x8xbf16> to vector<8x8xbf16>
    %222 = arith.truncf %178 : vector<8x256xf32> to vector<8x256xbf16>
    %cst_105 = arith.constant dense<0.000000e+00> : vector<8x256xf32>
    %223 = tpu.matmul %221, %222, %cst_105 {dimension_numbers = #tpu.dot_dimension_numbers<[1], [0], [0], [1], [0, 0, 1, 1], [], []>} : vector<8x8xbf16>, vector<8x256xbf16>, vector<8x256xf32> -> vector<8x256xf32>
    %224 = arith.addf %219, %223 : vector<8x256xf32>
    %c255_i32_106 = arith.constant 255 : i32
    %225 = tpu.dynamic_rotate %178 by %c255_i32_106 dim 1 : vector<8x256xf32>, i32 -> vector<8x256xf32>
    %cst_107 = arith.constant 0.000000e+00 : f32
    %226 = vector.shape_cast %73 : vector<1x256xi1> to vector<1x256xi1>
    %227 = vector.broadcast %226 : vector<1x256xi1> to vector<8x256xi1>
    %228 = vector.broadcast %cst_107 : f32 to vector<8x256xf32>
    %229 = arith.select %227, %225, %228 : vector<8x256xi1>, vector<8x256xf32>
    %c5_108 = arith.constant 5 : index
    %c0_109 = arith.constant 0 : index
    %c0_110 = arith.constant 0 : index
    %230 = vector.load %arg10[%c5_108, %c0_109, %c0_110] : memref<9x8x8xbf16, #tpu.memory_space<vmem>>, vector<1x8x8xbf16>
    %231 = vector.shape_cast %230 : vector<1x8x8xbf16> to vector<8x8xbf16>
    %232 = arith.truncf %229 : vector<8x256xf32> to vector<8x256xbf16>
    %cst_111 = arith.constant dense<0.000000e+00> : vector<8x256xf32>
    %233 = tpu.matmul %231, %232, %cst_111 {dimension_numbers = #tpu.dot_dimension_numbers<[1], [0], [0], [1], [0, 0, 1, 1], [], []>} : vector<8x8xbf16>, vector<8x256xbf16>, vector<8x256xf32> -> vector<8x256xf32>
    %234 = arith.addf %224, %233 : vector<8x256xf32>
    %c241_i32_112 = arith.constant 241 : i32
    %235 = tpu.dynamic_rotate %178 by %c241_i32_112 dim 1 : vector<8x256xf32>, i32 -> vector<8x256xf32>
    %cst_113 = arith.constant 0.000000e+00 : f32
    %236 = vector.shape_cast %80 : vector<1x256xi1> to vector<1x256xi1>
    %237 = vector.broadcast %236 : vector<1x256xi1> to vector<8x256xi1>
    %238 = vector.broadcast %cst_113 : f32 to vector<8x256xf32>
    %239 = arith.select %237, %235, %238 : vector<8x256xi1>, vector<8x256xf32>
    %c6_114 = arith.constant 6 : index
    %c0_115 = arith.constant 0 : index
    %c0_116 = arith.constant 0 : index
    %240 = vector.load %arg10[%c6_114, %c0_115, %c0_116] : memref<9x8x8xbf16, #tpu.memory_space<vmem>>, vector<1x8x8xbf16>
    %241 = vector.shape_cast %240 : vector<1x8x8xbf16> to vector<8x8xbf16>
    %242 = arith.truncf %239 : vector<8x256xf32> to vector<8x256xbf16>
    %cst_117 = arith.constant dense<0.000000e+00> : vector<8x256xf32>
    %243 = tpu.matmul %241, %242, %cst_117 {dimension_numbers = #tpu.dot_dimension_numbers<[1], [0], [0], [1], [0, 0, 1, 1], [], []>} : vector<8x8xbf16>, vector<8x256xbf16>, vector<8x256xf32> -> vector<8x256xf32>
    %244 = arith.addf %234, %243 : vector<8x256xf32>
    %c240_i32_118 = arith.constant 240 : i32
    %245 = tpu.dynamic_rotate %178 by %c240_i32_118 dim 1 : vector<8x256xf32>, i32 -> vector<8x256xf32>
    %cst_119 = arith.constant 0.000000e+00 : f32
    %246 = vector.shape_cast %77 : vector<1x256xi1> to vector<1x256xi1>
    %247 = vector.broadcast %246 : vector<1x256xi1> to vector<8x256xi1>
    %248 = vector.broadcast %cst_119 : f32 to vector<8x256xf32>
    %249 = arith.select %247, %245, %248 : vector<8x256xi1>, vector<8x256xf32>
    %c7_120 = arith.constant 7 : index
    %c0_121 = arith.constant 0 : index
    %c0_122 = arith.constant 0 : index
    %250 = vector.load %arg10[%c7_120, %c0_121, %c0_122] : memref<9x8x8xbf16, #tpu.memory_space<vmem>>, vector<1x8x8xbf16>
    %251 = vector.shape_cast %250 : vector<1x8x8xbf16> to vector<8x8xbf16>
    %252 = arith.truncf %249 : vector<8x256xf32> to vector<8x256xbf16>
    %cst_123 = arith.constant dense<0.000000e+00> : vector<8x256xf32>
    %253 = tpu.matmul %251, %252, %cst_123 {dimension_numbers = #tpu.dot_dimension_numbers<[1], [0], [0], [1], [0, 0, 1, 1], [], []>} : vector<8x8xbf16>, vector<8x256xbf16>, vector<8x256xf32> -> vector<8x256xf32>
    %254 = arith.addf %244, %253 : vector<8x256xf32>
    %c239_i32_124 = arith.constant 239 : i32
    %255 = tpu.dynamic_rotate %178 by %c239_i32_124 dim 1 : vector<8x256xf32>, i32 -> vector<8x256xf32>
    %cst_125 = arith.constant 0.000000e+00 : f32
    %256 = vector.shape_cast %81 : vector<1x256xi1> to vector<1x256xi1>
    %257 = vector.broadcast %256 : vector<1x256xi1> to vector<8x256xi1>
    %258 = vector.broadcast %cst_125 : f32 to vector<8x256xf32>
    %259 = arith.select %257, %255, %258 : vector<8x256xi1>, vector<8x256xf32>
    %c8_126 = arith.constant 8 : index
    %c0_127 = arith.constant 0 : index
    %c0_128 = arith.constant 0 : index
    %260 = vector.load %arg10[%c8_126, %c0_127, %c0_128] : memref<9x8x8xbf16, #tpu.memory_space<vmem>>, vector<1x8x8xbf16>
    %261 = vector.shape_cast %260 : vector<1x8x8xbf16> to vector<8x8xbf16>
    %262 = arith.truncf %259 : vector<8x256xf32> to vector<8x256xbf16>
    %cst_129 = arith.constant dense<0.000000e+00> : vector<8x256xf32>
    %263 = tpu.matmul %261, %262, %cst_129 {dimension_numbers = #tpu.dot_dimension_numbers<[1], [0], [0], [1], [0, 0, 1, 1], [], []>} : vector<8x8xbf16>, vector<8x256xbf16>, vector<8x256xf32> -> vector<8x256xf32>
    %264 = arith.addf %254, %263 : vector<8x256xf32>
    %c0_130 = arith.constant 0 : index
    %c0_131 = arith.constant 0 : index
    %265 = vector.load %arg11[%c0_130, %c0_131] : memref<8x1xf32, #tpu.memory_space<vmem>>, vector<8x1xf32>
    %266 = vector.broadcast %265 : vector<8x1xf32> to vector<8x256xf32>
    %267 = arith.addf %264, %266 : vector<8x256xf32>
    %cst_132 = arith.constant 5.000000e-01 : f32
    %268 = vector.broadcast %cst_132 : f32 to vector<8x256xf32>
    %269 = arith.mulf %268, %267 : vector<8x256xf32>
    %270 = math.tanh %269 : vector<8x256xf32>
    %cst_133 = arith.constant 5.000000e-01 : f32
    %271 = vector.broadcast %cst_133 : f32 to vector<8x256xf32>
    %272 = arith.mulf %271, %270 : vector<8x256xf32>
    %cst_134 = arith.constant 5.000000e-01 : f32
    %273 = vector.broadcast %cst_134 : f32 to vector<8x256xf32>
    %274 = arith.addf %272, %273 : vector<8x256xf32>
    %275 = arith.mulf %267, %274 : vector<8x256xf32>
    %276 = arith.addf %51, %275 : vector<8x256xf32>
    %c0_135 = arith.constant 0 : index
    %c0_136 = arith.constant 0 : index
    %277 = vector.load %arg12[%c0_135, %c0_136] : memref<16x8xbf16, #tpu.memory_space<vmem>>, vector<16x8xbf16>
    %278 = arith.truncf %276 : vector<8x256xf32> to vector<8x256xbf16>
    %cst_137 = arith.constant dense<0.000000e+00> : vector<16x256xf32>
    %279 = tpu.matmul %277, %278, %cst_137 {dimension_numbers = #tpu.dot_dimension_numbers<[1], [0], [0], [1], [0, 0, 1, 1], [], []>} : vector<16x8xbf16>, vector<8x256xbf16>, vector<16x256xf32> -> vector<16x256xf32>
    %c0_138 = arith.constant 0 : index
    %c0_139 = arith.constant 0 : index
    %280 = vector.load %arg13[%c0_138, %c0_139] : memref<16x8xbf16, #tpu.memory_space<vmem>>, vector<16x8xbf16>
    %281 = arith.truncf %52 : vector<8x256xf32> to vector<8x256xbf16>
    %cst_140 = arith.constant dense<0.000000e+00> : vector<16x256xf32>
    %282 = tpu.matmul %280, %281, %cst_140 {dimension_numbers = #tpu.dot_dimension_numbers<[1], [0], [0], [1], [0, 0, 1, 1], [], []>} : vector<16x8xbf16>, vector<8x256xbf16>, vector<16x256xf32> -> vector<16x256xf32>
    %283 = arith.addf %279, %282 : vector<16x256xf32>
    %c0_141 = arith.constant 0 : index
    %c0_142 = arith.constant 0 : index
    %284 = vector.load %arg14[%c0_141, %c0_142] : memref<16x1xf32, #tpu.memory_space<vmem>>, vector<16x1xf32>
    %285 = vector.broadcast %284 : vector<16x1xf32> to vector<16x256xf32>
    %286 = arith.addf %283, %285 : vector<16x256xf32>
    %cst_143 = arith.constant 5.000000e-01 : f32
    %287 = vector.broadcast %cst_143 : f32 to vector<16x256xf32>
    %288 = arith.mulf %287, %286 : vector<16x256xf32>
    %289 = math.tanh %288 : vector<16x256xf32>
    %cst_144 = arith.constant 5.000000e-01 : f32
    %290 = vector.broadcast %cst_144 : f32 to vector<16x256xf32>
    %291 = arith.mulf %290, %289 : vector<16x256xf32>
    %cst_145 = arith.constant 5.000000e-01 : f32
    %292 = vector.broadcast %cst_145 : f32 to vector<16x256xf32>
    %293 = arith.addf %291, %292 : vector<16x256xf32>
    %294 = arith.mulf %286, %293 : vector<16x256xf32>
    %c0_146 = arith.constant 0 : index
    %c0_147 = arith.constant 0 : index
    %c0_148 = arith.constant 0 : index
    %295 = vector.load %arg15[%c0_146, %c0_147, %c0_148] : memref<1x16x256xf32, #tpu.memory_space<vmem>>, vector<1x16x256xf32>
    %296 = vector.shape_cast %295 : vector<1x16x256xf32> to vector<16x256xf32>
    %297 = vector.shape_cast %294 : vector<16x256xf32> to vector<1x16x256xf32>
    tpu.vector_store %arg15[%c0_146, %c0_147, %c0_148], %297 {strides = array<i32>} : memref<1x16x256xf32, #tpu.memory_space<vmem>>, vector<1x16x256xf32>,
    return
  }
  func.func @transform_0(%arg0: i32) -> (i32, i32, i32) {
    %c0_i32 = arith.constant 0 : i32
    %c0_i32_0 = arith.constant 0 : i32
    %c0_i32_1 = arith.constant 0 : i32
    return %arg0, %c0_i32, %c0_i32_0 : i32, i32, i32
  }
  func.func @transform_1(%arg0: i32) -> (i32, i32) {
    %c0_i32 = arith.constant 0 : i32
    %c0_i32_0 = arith.constant 0 : i32
    %c0_i32_1 = arith.constant 0 : i32
    return %c0_i32, %c0_i32_0 : i32, i32
  }
  func.func @transform_2(%arg0: i32) -> (i32, i32) {
    %c0_i32 = arith.constant 0 : i32
    %c0_i32_0 = arith.constant 0 : i32
    %c0_i32_1 = arith.constant 0 : i32
    return %c0_i32, %c0_i32_0 : i32, i32
  }
  func.func @transform_3(%arg0: i32) -> (i32, i32) {
    %c0_i32 = arith.constant 0 : i32
    %c0_i32_0 = arith.constant 0 : i32
    %c0_i32_1 = arith.constant 0 : i32
    return %c0_i32, %c0_i32_0 : i32, i32
  }
  func.func @transform_4(%arg0: i32) -> (i32, i32) {
    %c0_i32 = arith.constant 0 : i32
    %c0_i32_0 = arith.constant 0 : i32
    %c0_i32_1 = arith.constant 0 : i32
    return %c0_i32, %c0_i32_0 : i32, i32
  }
  func.func @transform_5(%arg0: i32) -> (i32, i32) {
    %c0_i32 = arith.constant 0 : i32
    %c0_i32_0 = arith.constant 0 : i32
    %c0_i32_1 = arith.constant 0 : i32
    return %c0_i32, %c0_i32_0 : i32, i32
  }
  func.func @transform_6(%arg0: i32) -> (i32, i32) {
    %c0_i32 = arith.constant 0 : i32
    %c0_i32_0 = arith.constant 0 : i32
    %c0_i32_1 = arith.constant 0 : i32
    return %c0_i32, %c0_i32_0 : i32, i32
  }
  func.func @transform_7(%arg0: i32) -> (i32, i32, i32) {
    %c0_i32 = arith.constant 0 : i32
    %c0_i32_0 = arith.constant 0 : i32
    %c0_i32_1 = arith.constant 0 : i32
    %c0_i32_2 = arith.constant 0 : i32
    return %c0_i32, %c0_i32_0, %c0_i32_1 : i32, i32, i32
  }
  func.func @transform_8(%arg0: i32) -> (i32, i32) {
    %c0_i32 = arith.constant 0 : i32
    %c0_i32_0 = arith.constant 0 : i32
    %c0_i32_1 = arith.constant 0 : i32
    return %c0_i32, %c0_i32_0 : i32, i32
  }
  func.func @transform_9(%arg0: i32) -> (i32, i32, i32) {
    %c0_i32 = arith.constant 0 : i32
    %c0_i32_0 = arith.constant 0 : i32
    %c0_i32_1 = arith.constant 0 : i32
    %c0_i32_2 = arith.constant 0 : i32
    return %c0_i32, %c0_i32_0, %c0_i32_1 : i32, i32, i32
  }
  func.func @transform_10(%arg0: i32) -> (i32, i32) {
    %c0_i32 = arith.constant 0 : i32
    %c0_i32_0 = arith.constant 0 : i32
    %c0_i32_1 = arith.constant 0 : i32
    return %c0_i32, %c0_i32_0 : i32, i32
  }
  func.func @transform_11(%arg0: i32) -> (i32, i32) {
    %c0_i32 = arith.constant 0 : i32
    %c0_i32_0 = arith.constant 0 : i32
    %c0_i32_1 = arith.constant 0 : i32
    return %c0_i32, %c0_i32_0 : i32, i32
  }
  func.func @transform_12(%arg0: i32) -> (i32, i32) {
    %c0_i32 = arith.constant 0 : i32
    %c0_i32_0 = arith.constant 0 : i32
    %c0_i32_1 = arith.constant 0 : i32
    return %c0_i32, %c0_i32_0 : i32, i32
  }
  func.func @transform_13(%arg0: i32) -> (i32, i32) {
    %c0_i32 = arith.constant 0 : i32
    %c0_i32_0 = arith.constant 0 : i32
    %c0_i32_1 = arith.constant 0 : i32
    return %c0_i32, %c0_i32_0 : i32, i32
  }
  func.func @transform_14(%arg0: i32) -> (i32, i32, i32) {
    %c0_i32 = arith.constant 0 : i32
    %c0_i32_0 = arith.constant 0 : i32
    %c0_i32_1 = arith.constant 0 : i32
    return %arg0, %c0_i32, %c0_i32_0 : i32, i32, i32
  }
}

</mosaic_0001>

<llo_original>
// kernel: tpu_custom_call.1
$region0: #{tpu_custom_call.1}
  #allocation0 [shape = 'u32[]', space=smem, size = 0x4, offset = 0x4, fixed_abs, tag = 'smem constant byte address 0x4 - core index']
  #allocation1 [shape = 'u32[72,128]{1,0:T(1,128)}', space=vmem, size = 0x9000, scoped, tag = 'internal scratch']
  %s0 = inlined_call_operand.vmem [shape: f32[2,16,256], index: 0, kind: input, shape index: {}]
  %s1 = inlined_call_operand.vmem [shape: f32[16,16], index: 1, kind: input, shape index: {}]
  %s2 = inlined_call_operand.vmem [shape: f32[1,16], index: 2, kind: input, shape index: {}]
  %s3 = inlined_call_operand.vmem [shape: bf16[16,16], index: 3, kind: input, shape index: {}]
  %s4 = inlined_call_operand.vmem [shape: f32[1,16], index: 4, kind: input, shape index: {}]
  %s5 = inlined_call_operand.vmem [shape: f32[16,16], index: 5, kind: input, shape index: {}]
  %s6 = inlined_call_operand.vmem [shape: f32[16,1], index: 6, kind: input, shape index: {}]
  %s7 = inlined_call_operand.vmem [shape: bf16[9,8,8], index: 7, kind: input, shape index: {}]
  %s8 = inlined_call_operand.vmem [shape: f32[8,1], index: 8, kind: input, shape index: {}]
  %s9 = inlined_call_operand.vmem [shape: bf16[9,8,8], index: 9, kind: input, shape index: {}]
  %s10 = inlined_call_operand.vmem [shape: f32[8,1], index: 10, kind: input, shape index: {}]
  %s11 = inlined_call_operand.vmem [shape: bf16[16,8], index: 11, kind: input, shape index: {}]
  %s12 = inlined_call_operand.vmem [shape: bf16[16,8], index: 12, kind: input, shape index: {}]
  %s13 = inlined_call_operand.vmem [shape: f32[16,1], index: 13, kind: input, shape index: {}]
  %s14 = inlined_call_operand.hbm [shape: f32[2,16,256], index: 14, kind: output, shape index: {}]
  %s15 = sld [smem:[#allocation0]]
  $region89: #{tpu_custom_call.1} parent=0
    _
  %s17 = ssub.s32 1, %s15
  %s18 = scalar_select 0, %s17, %s15
  $region1: #{tpu_custom_call.1} parent=0
    #allocation2 [shape = 'u8[32768]{0}', space=vmem, size = 0x8000, scoped, tag = 'output window, operand 0']
    #allocation3 [shape = 's32[2]{0}', space=sflag, size = 0x8, scoped, tag = 'scoped memory for tpu_custom_call.1']
    %19 = vsyncpa [#allocation3], 0
    %s20 = scalar_lea.sflag [#allocation3], 1
    %21 = vsyncpa %s20, 0
    loop: start=0, step=1, limit=4
    $region2: #{tpu_custom_call.1} parent=1 // loop_pre_header
      _
    $region3: #{tpu_custom_call.1} parent=1 // loop_header
      %s23 = sphi 0, %s27
      %p24 = scmp.ge.s32.totalorder %s23, 4
      %s33 = sphi 0, %s35
      %s36 = sphi 0, %s33
      %s37 = sphi 0, %s36
      %s53 = sphi 0, %s37
      %s57 = sphi 0, %s57
      %s59 = sphi 0, %s57
      %s60 = sphi 0, %s59
      %s74 = sphi 0, %s60
      %s78 = sphi 0, %s78
      %s80 = sphi 0, %s78
      %s81 = sphi 0, %s80
      %s95 = sphi 0, %s81
      %s99 = sphi 0, %s99
      %s101 = sphi 0, %s99
      %s102 = sphi 0, %s101
      %s116 = sphi 0, %s102
      %s120 = sphi 0, %s120
      %s122 = sphi 0, %s120
      %s123 = sphi 0, %s122
      %s137 = sphi 0, %s123
      %s141 = sphi 0, %s141
      %s143 = sphi 0, %s141
      %s144 = sphi 0, %s143
      %s158 = sphi 0, %s144
      %s162 = sphi 0, %s162
      %s164 = sphi 0, %s162
      %s165 = sphi 0, %s164
      %s179 = sphi 0, %s165
      %s183 = sphi 0, %s183
      %s185 = sphi 0, %s183
      %s186 = sphi 0, %s185
      %s200 = sphi 0, %s186
      %s204 = sphi 0, %s204
      %s206 = sphi 0, %s204
      %s207 = sphi 0, %s206
      %s221 = sphi 0, %s207
      %s225 = sphi 0, %s225
      %s227 = sphi 0, %s225
      %s228 = sphi 0, %s227
      %s242 = sphi 0, %s228
      %s246 = sphi 0, %s246
      %s248 = sphi 0, %s246
      %s249 = sphi 0, %s248
      %s263 = sphi 0, %s249
      %s267 = sphi 0, %s267
      %s269 = sphi 0, %s267
      %s270 = sphi 0, %s269
      %s284 = sphi 0, %s270
      %s288 = sphi 0, %s288
      %s290 = sphi 0, %s288
      %s291 = sphi 0, %s290
      %s305 = sphi 0, %s291
      %s309 = sphi 0, %s309
      %s311 = sphi 0, %s309
      %s312 = sphi 0, %s311
      %s326 = sphi 0, %s312
      %s332 = sphi 0, %s334
      %s335 = sphi 0, %s332
      %s336 = sphi 0, %s335
      %s352 = sphi 0, %s336
    $region4: #{tpu_custom_call.1} parent=1 // loop_header_branch
      %26 = sbr.rel (%p24) target = $region8
    $region5: #{tpu_custom_call.1} parent=1 // loop_body
      %s28 = ssub.s32 %s23, 1
      %s29 = ssub.s32 %s23, 2
      %s30 = sadd.s32 %s23, 1
      %s31 = ssub.s32 %s23, %s30
      %p32 = scmp.eq.s32.totalorder %s31, 0
      %s34 = sadd.s32 %s33, 1
      %s35 = scalar_select %p32, %s33, %s34
      %p38 = pneg %p32
      %p39 = scmp.eq.s32.totalorder %s23, 1
      %p40 = por %p38, %p39
      %p41 = scmp.ne.s32.totalorder %s33, %s36
      %p42 = scmp.eq.s32.totalorder %s23, 0
      %p43 = por %p41, %p42
      %p44 = scmp.ne.s32.totalorder %s33, %s36
      %p45 = scmp.eq.s32.totalorder %s28, 1
      %p46 = por %p44, %p45
      %p47 = scmp.ne.s32.totalorder %s36, %s37
      %p48 = scmp.eq.s32.totalorder %s28, 0
      %p49 = por %p47, %p48
      %p50 = scmp.ne.s32.totalorder %s36, %s37
      %p51 = scmp.eq.s32.totalorder %s29, 1
      %p52 = por %p50, %p51
      %p54 = scmp.ne.s32.totalorder %s37, %s53
      %p55 = scmp.eq.s32.totalorder %s29, 0
      %p56 = por %p54, %p55
      %s58 = sadd.s32 %s57, 1
      %p61 = scmp.eq.s32.totalorder %s23, 1
      %p62 = scmp.ne.s32.totalorder %s57, %s59
      %p63 = scmp.eq.s32.totalorder %s23, 0
      %p64 = por %p62, %p63
      %p65 = scmp.ne.s32.totalorder %s57, %s59
      %p66 = scmp.eq.s32.totalorder %s28, 1
      %p67 = por %p65, %p66
      %p68 = scmp.ne.s32.totalorder %s59, %s60
      %p69 = scmp.eq.s32.totalorder %s28, 0
      %p70 = por %p68, %p69
      %p71 = scmp.ne.s32.totalorder %s59, %s60
      %p72 = scmp.eq.s32.totalorder %s29, 1
      %p73 = por %p71, %p72
      %p75 = scmp.ne.s32.totalorder %s60, %s74
      %p76 = scmp.eq.s32.totalorder %s29, 0
      %p77 = por %p75, %p76
      %s79 = sadd.s32 %s78, 1
      %p82 = scmp.eq.s32.totalorder %s23, 1
      %p83 = scmp.ne.s32.totalorder %s78, %s80
      %p84 = scmp.eq.s32.totalorder %s23, 0
      %p85 = por %p83, %p84
      %p86 = scmp.ne.s32.totalorder %s78, %s80
      %p87 = scmp.eq.s32.totalorder %s28, 1
      %p88 = por %p86, %p87
      %p89 = scmp.ne.s32.totalorder %s80, %s81
      %p90 = scmp.eq.s32.totalorder %s28, 0
      %p91 = por %p89, %p90
      %p92 = scmp.ne.s32.totalorder %s80, %s81
      %p93 = scmp.eq.s32.totalorder %s29, 1
      %p94 = por %p92, %p93
      %p96 = scmp.ne.s32.totalorder %s81, %s95
      %p97 = scmp.eq.s32.totalorder %s29, 0
      %p98 = por %p96, %p97
      %s100 = sadd.s32 %s99, 1
      %p103 = scmp.eq.s32.totalorder %s23, 1
      %p104 = scmp.ne.s32.totalorder %s99, %s101
      %p105 = scmp.eq.s32.totalorder %s23, 0
      %p106 = por %p104, %p105
      %p107 = scmp.ne.s32.totalorder %s99, %s101
      %p108 = scmp.eq.s32.totalorder %s28, 1
      %p109 = por %p107, %p108
      %p110 = scmp.ne.s32.totalorder %s101, %s102
      %p111 = scmp.eq.s32.totalorder %s28, 0
      %p112 = por %p110, %p111
      %p113 = scmp.ne.s32.totalorder %s101, %s102
      %p114 = scmp.eq.s32.totalorder %s29, 1
      %p115 = por %p113, %p114
      %p117 = scmp.ne.s32.totalorder %s102, %s116
      %p118 = scmp.eq.s32.totalorder %s29, 0
      %p119 = por %p117, %p118
      %s121 = sadd.s32 %s120, 1
      %p124 = scmp.eq.s32.totalorder %s23, 1
      %p125 = scmp.ne.s32.totalorder %s120, %s122
      %p126 = scmp.eq.s32.totalorder %s23, 0
      %p127 = por %p125, %p126
      %p128 = scmp.ne.s32.totalorder %s120, %s122
      %p129 = scmp.eq.s32.totalorder %s28, 1
      %p130 = por %p128, %p129
      %p131 = scmp.ne.s32.totalorder %s122, %s123
      %p132 = scmp.eq.s32.totalorder %s28, 0
      %p133 = por %p131, %p132
      %p134 = scmp.ne.s32.totalorder %s122, %s123
      %p135 = scmp.eq.s32.totalorder %s29, 1
      %p136 = por %p134, %p135
      %p138 = scmp.ne.s32.totalorder %s123, %s137
      %p139 = scmp.eq.s32.totalorder %s29, 0
      %p140 = por %p138, %p139
      %s142 = sadd.s32 %s141, 1
      %p145 = scmp.eq.s32.totalorder %s23, 1
      %p146 = scmp.ne.s32.totalorder %s141, %s143
      %p147 = scmp.eq.s32.totalorder %s23, 0
      %p148 = por %p146, %p147
      %p149 = scmp.ne.s32.totalorder %s141, %s143
      %p150 = scmp.eq.s32.totalorder %s28, 1
      %p151 = por %p149, %p150
      %p152 = scmp.ne.s32.totalorder %s143, %s144
      %p153 = scmp.eq.s32.totalorder %s28, 0
      %p154 = por %p152, %p153
      %p155 = scmp.ne.s32.totalorder %s143, %s144
      %p156 = scmp.eq.s32.totalorder %s29, 1
      %p157 = por %p155, %p156
      %p159 = scmp.ne.s32.totalorder %s144, %s158
      %p160 = scmp.eq.s32.totalorder %s29, 0
      %p161 = por %p159, %p160
      %s163 = sadd.s32 %s162, 1
      %p166 = scmp.eq.s32.totalorder %s23, 1
      %p167 = scmp.ne.s32.totalorder %s162, %s164
      %p168 = scmp.eq.s32.totalorder %s23, 0
      %p169 = por %p167, %p168
      %p170 = scmp.ne.s32.totalorder %s162, %s164
      %p171 = scmp.eq.s32.totalorder %s28, 1
      %p172 = por %p170, %p171
      %p173 = scmp.ne.s32.totalorder %s164, %s165
      %p174 = scmp.eq.s32.totalorder %s28, 0
      %p175 = por %p173, %p174
      %p176 = scmp.ne.s32.totalorder %s164, %s165
      %p177 = scmp.eq.s32.totalorder %s29, 1
      %p178 = por %p176, %p177
      %p180 = scmp.ne.s32.totalorder %s165, %s179
      %p181 = scmp.eq.s32.totalorder %s29, 0
      %p182 = por %p180, %p181
      %s184 = sadd.s32 %s183, 1
      %p187 = scmp.eq.s32.totalorder %s23, 1
      %p188 = scmp.ne.s32.totalorder %s183, %s185
      %p189 = scmp.eq.s32.totalorder %s23, 0
      %p190 = por %p188, %p189
      %p191 = scmp.ne.s32.totalorder %s183, %s185
      %p192 = scmp.eq.s32.totalorder %s28, 1
      %p193 = por %p191, %p192
      %p194 = scmp.ne.s32.totalorder %s185, %s186
      %p195 = scmp.eq.s32.totalorder %s28, 0
      %p196 = por %p194, %p195
      %p197 = scmp.ne.s32.totalorder %s185, %s186
      %p198 = scmp.eq.s32.totalorder %s29, 1
      %p199 = por %p197, %p198
      %p201 = scmp.ne.s32.totalorder %s186, %s200
      %p202 = scmp.eq.s32.totalorder %s29, 0
      %p203 = por %p201, %p202
      %s205 = sadd.s32 %s204, 1
      %p208 = scmp.eq.s32.totalorder %s23, 1
      %p209 = scmp.ne.s32.totalorder %s204, %s206
      %p210 = scmp.eq.s32.totalorder %s23, 0
      %p211 = por %p209, %p210
      %p212 = scmp.ne.s32.totalorder %s204, %s206
      %p213 = scmp.eq.s32.totalorder %s28, 1
      %p214 = por %p212, %p213
      %p215 = scmp.ne.s32.totalorder %s206, %s207
      %p216 = scmp.eq.s32.totalorder %s28, 0
      %p217 = por %p215, %p216
      %p218 = scmp.ne.s32.totalorder %s206, %s207
      %p219 = scmp.eq.s32.totalorder %s29, 1
      %p220 = por %p218, %p219
      %p222 = scmp.ne.s32.totalorder %s207, %s221
      %p223 = scmp.eq.s32.totalorder %s29, 0
      %p224 = por %p222, %p223
      %s226 = sadd.s32 %s225, 1
      %p229 = scmp.eq.s32.totalorder %s23, 1
      %p230 = scmp.ne.s32.totalorder %s225, %s227
      %p231 = scmp.eq.s32.totalorder %s23, 0
      %p232 = por %p230, %p231
      %p233 = scmp.ne.s32.totalorder %s225, %s227
      %p234 = scmp.eq.s32.totalorder %s28, 1
      %p235 = por %p233, %p234
      %p236 = scmp.ne.s32.totalorder %s227, %s228
      %p237 = scmp.eq.s32.totalorder %s28, 0
      %p238 = por %p236, %p237
      %p239 = scmp.ne.s32.totalorder %s227, %s228
      %p240 = scmp.eq.s32.totalorder %s29, 1
      %p241 = por %p239, %p240
      %p243 = scmp.ne.s32.totalorder %s228, %s242
      %p244 = scmp.eq.s32.totalorder %s29, 0
      %p245 = por %p243, %p244
      %s247 = sadd.s32 %s246, 1
      %p250 = scmp.eq.s32.totalorder %s23, 1
      %p251 = scmp.ne.s32.totalorder %s246, %s248
      %p252 = scmp.eq.s32.totalorder %s23, 0
      %p253 = por %p251, %p252
      %p254 = scmp.ne.s32.totalorder %s246, %s248
      %p255 = scmp.eq.s32.totalorder %s28, 1
      %p256 = por %p254, %p255
      %p257 = scmp.ne.s32.totalorder %s248, %s249
      %p258 = scmp.eq.s32.totalorder %s28, 0
      %p259 = por %p257, %p258
      %p260 = scmp.ne.s32.totalorder %s248, %s249
      %p261 = scmp.eq.s32.totalorder %s29, 1
      %p262 = por %p260, %p261
      %p264 = scmp.ne.s32.totalorder %s249, %s263
      %p265 = scmp.eq.s32.totalorder %s29, 0
      %p266 = por %p264, %p265
      %s268 = sadd.s32 %s267, 1
      %p271 = scmp.eq.s32.totalorder %s23, 1
      %p272 = scmp.ne.s32.totalorder %s267, %s269
      %p273 = scmp.eq.s32.totalorder %s23, 0
      %p274 = por %p272, %p273
      %p275 = scmp.ne.s32.totalorder %s267, %s269
      %p276 = scmp.eq.s32.totalorder %s28, 1
      %p277 = por %p275, %p276
      %p278 = scmp.ne.s32.totalorder %s269, %s270
      %p279 = scmp.eq.s32.totalorder %s28, 0
      %p280 = por %p278, %p279
      %p281 = scmp.ne.s32.totalorder %s269, %s270
      %p282 = scmp.eq.s32.totalorder %s29, 1
      %p283 = por %p281, %p282
      %p285 = scmp.ne.s32.totalorder %s270, %s284
      %p286 = scmp.eq.s32.totalorder %s29, 0
      %p287 = por %p285, %p286
      %s289 = sadd.s32 %s288, 1
      %p292 = scmp.eq.s32.totalorder %s23, 1
      %p293 = scmp.ne.s32.totalorder %s288, %s290
      %p294 = scmp.eq.s32.totalorder %s23, 0
      %p295 = por %p293, %p294
      %p296 = scmp.ne.s32.totalorder %s288, %s290
      %p297 = scmp.eq.s32.totalorder %s28, 1
      %p298 = por %p296, %p297
      %p299 = scmp.ne.s32.totalorder %s290, %s291
      %p300 = scmp.eq.s32.totalorder %s28, 0
      %p301 = por %p299, %p300
      %p302 = scmp.ne.s32.totalorder %s290, %s291
      %p303 = scmp.eq.s32.totalorder %s29, 1
      %p304 = por %p302, %p303
      %p306 = scmp.ne.s32.totalorder %s291, %s305
      %p307 = scmp.eq.s32.totalorder %s29, 0
      %p308 = por %p306, %p307
      %s310 = sadd.s32 %s309, 1
      %p313 = scmp.eq.s32.totalorder %s23, 1
      %p314 = scmp.ne.s32.totalorder %s309, %s311
      %p315 = scmp.eq.s32.totalorder %s23, 0
      %p316 = por %p314, %p315
      %p317 = scmp.ne.s32.totalorder %s309, %s311
      %p318 = scmp.eq.s32.totalorder %s28, 1
      %p319 = por %p317, %p318
      %p320 = scmp.ne.s32.totalorder %s311, %s312
      %p321 = scmp.eq.s32.totalorder %s28, 0
      %p322 = por %p320, %p321
      %p323 = scmp.ne.s32.totalorder %s311, %s312
      %p324 = scmp.eq.s32.totalorder %s29, 1
      %p325 = por %p323, %p324
      %p327 = scmp.ne.s32.totalorder %s312, %s326
      %p328 = scmp.eq.s32.totalorder %s29, 0
      %p329 = por %p327, %p328
      %s330 = ssub.s32 %s23, %s30
      %p331 = scmp.eq.s32.totalorder %s330, 0
      %s333 = sadd.s32 %s332, 1
      %s334 = scalar_select %p331, %s332, %s333
      %p337 = pneg %p331
      %p338 = scmp.eq.s32.totalorder %s23, 1
      %p339 = por %p337, %p338
      %p340 = scmp.ne.s32.totalorder %s332, %s335
      %p341 = scmp.eq.s32.totalorder %s23, 0
      %p342 = por %p340, %p341
      %p343 = scmp.ne.s32.totalorder %s332, %s335
      %p344 = scmp.eq.s32.totalorder %s28, 1
      %p345 = por %p343, %p344
      %p346 = scmp.ne.s32.totalorder %s335, %s336
      %p347 = scmp.eq.s32.totalorder %s28, 0
      %p348 = por %p346, %p347
      %p349 = scmp.ne.s32.totalorder %s335, %s336
      %p350 = scmp.eq.s32.totalorder %s29, 1
      %p351 = por %p349, %p350
      %p353 = scmp.ne.s32.totalorder %s336, %s352
      %p354 = scmp.eq.s32.totalorder %s29, 0
      %p355 = por %p353, %p354
      %p356 = scmp.le.s32.totalorder 1, %s23
      %p357 = scmp.lt.s32.totalorder %s23, 3
      %p358 = pnand %p356, %p357
      %p359 = pneg %p358
      // Predicated region
      $region9: #{tpu_custom_call.1} parent=5 // pred_check
        _
      $region10: #{tpu_custom_call.1} parent=5 // pred_check_branch
        %361 = sbr.rel (%p358) target = $region12
      $region11: #{tpu_custom_call.1} parent=5 // pred_region
        %s362 = ssub.s32 %s23, 1
        // Predicated region
        $region13: #{tpu_custom_call.1} parent=11 // pred_check
          %p363 = pneg %p70
        $region14: #{tpu_custom_call.1} parent=11 // pred_check_branch
          %365 = sbr.rel (%p363) target = $region16
        $region15: #{tpu_custom_call.1} parent=11 // pred_region
          _
        $region16: #{tpu_custom_call.1} parent=11 // pred_fallthru
          _
        // Predicated region
        $region17: #{tpu_custom_call.1} parent=11 // pred_check
          %p366 = pneg %p91
        $region18: #{tpu_custom_call.1} parent=11 // pred_check_branch
          %368 = sbr.rel (%p366) target = $region20
        $region19: #{tpu_custom_call.1} parent=11 // pred_region
          _
        $region20: #{tpu_custom_call.1} parent=11 // pred_fallthru
          _
        // Predicated region
        $region21: #{tpu_custom_call.1} parent=11 // pred_check
          %p369 = pneg %p112
        $region22: #{tpu_custom_call.1} parent=11 // pred_check_branch
          %371 = sbr.rel (%p369) target = $region24
        $region23: #{tpu_custom_call.1} parent=11 // pred_region
          _
        $region24: #{tpu_custom_call.1} parent=11 // pred_fallthru
          _
        // Predicated region
        $region25: #{tpu_custom_call.1} parent=11 // pred_check
          %p372 = pneg %p133
        $region26: #{tpu_custom_call.1} parent=11 // pred_check_branch
          %374 = sbr.rel (%p372) target = $region28
        $region27: #{tpu_custom_call.1} parent=11 // pred_region
          _
        $region28: #{tpu_custom_call.1} parent=11 // pred_fallthru
          _
        // Predicated region
        $region29: #{tpu_custom_call.1} parent=11 // pred_check
          %p375 = pneg %p154
        $region30: #{tpu_custom_call.1} parent=11 // pred_check_branch
          %377 = sbr.rel (%p375) target = $region32
        $region31: #{tpu_custom_call.1} parent=11 // pred_region
          _
        $region32: #{tpu_custom_call.1} parent=11 // pred_fallthru
          _
        // Predicated region
        $region33: #{tpu_custom_call.1} parent=11 // pred_check
          %p378 = pneg %p175
        $region34: #{tpu_custom_call.1} parent=11 // pred_check_branch
          %380 = sbr.rel (%p378) target = $region36
        $region35: #{tpu_custom_call.1} parent=11 // pred_region
          _
        $region36: #{tpu_custom_call.1} parent=11 // pred_fallthru
          _
        // Predicated region
        $region37: #{tpu_custom_call.1} parent=11 // pred_check
          %p381 = pneg %p196
        $region38: #{tpu_custom_call.1} parent=11 // pred_check_branch
          %383 = sbr.rel (%p381) target = $region40
        $region39: #{tpu_custom_call.1} parent=11 // pred_region
          _
        $region40: #{tpu_custom_call.1} parent=11 // pred_fallthru
          _
        // Predicated region
        $region41: #{tpu_custom_call.1} parent=11 // pred_check
          %p384 = pneg %p217
        $region42: #{tpu_custom_call.1} parent=11 // pred_check_branch
          %386 = sbr.rel (%p384) target = $region44
        $region43: #{tpu_custom_call.1} parent=11 // pred_region
          _
        $region44: #{tpu_custom_call.1} parent=11 // pred_fallthru
          _
        // Predicated region
        $region45: #{tpu_custom_call.1} parent=11 // pred_check
          %p387 = pneg %p238
        $region46: #{tpu_custom_call.1} parent=11 // pred_check_branch
          %389 = sbr.rel (%p387) target = $region48
        $region47: #{tpu_custom_call.1} parent=11 // pred_region
          _
        $region48: #{tpu_custom_call.1} parent=11 // pred_fallthru
          _
        // Predicated region
        $region49: #{tpu_custom_call.1} parent=11 // pred_check
          %p390 = pneg %p259
        $region50: #{tpu_custom_call.1} parent=11 // pred_check_branch
          %392 = sbr.rel (%p390) target = $region52
        $region51: #{tpu_custom_call.1} parent=11 // pred_region
          _
        $region52: #{tpu_custom_call.1} parent=11 // pred_fallthru
          _
        // Predicated region
        $region53: #{tpu_custom_call.1} parent=11 // pred_check
          %p393 = pneg %p280
        $region54: #{tpu_custom_call.1} parent=11 // pred_check_branch
          %395 = sbr.rel (%p393) target = $region56
        $region55: #{tpu_custom_call.1} parent=11 // pred_region
          _
        $region56: #{tpu_custom_call.1} parent=11 // pred_fallthru
          _
        // Predicated region
        $region57: #{tpu_custom_call.1} parent=11 // pred_check
          %p396 = pneg %p301
        $region58: #{tpu_custom_call.1} parent=11 // pred_check_branch
          %398 = sbr.rel (%p396) target = $region60
        $region59: #{tpu_custom_call.1} parent=11 // pred_region
          _
        $region60: #{tpu_custom_call.1} parent=11 // pred_fallthru
          _
        // Predicated region
        $region61: #{tpu_custom_call.1} parent=11 // pred_check
          %p399 = pneg %p322
        $region62: #{tpu_custom_call.1} parent=11 // pred_check_branch
          %401 = sbr.rel (%p399) target = $region64
        $region63: #{tpu_custom_call.1} parent=11 // pred_region
          _
        $region64: #{tpu_custom_call.1} parent=11 // pred_fallthru
          _
      $region12: #{tpu_custom_call.1} parent=5 // pred_fallthru
        _
      %p402 = scmp.lt.s32.totalorder %s23, 2
      // Predicated region
      $region65: #{tpu_custom_call.1} parent=5 // pred_check
        %p403 = pneg %p402
      $region66: #{tpu_custom_call.1} parent=5 // pred_check_branch
        %405 = sbr.rel (%p403) target = $region68
      $region67: #{tpu_custom_call.1} parent=5 // pred_region
        // Predicated region
        $region69: #{tpu_custom_call.1} parent=67 // pred_check
          %p406 = pneg %p43
        $region70: #{tpu_custom_call.1} parent=67 // pred_check_branch
          %408 = sbr.rel (%p406) target = $region72
        $region71: #{tpu_custom_call.1} parent=67 // pred_region
          %p409 = scmp.lt.s32.totalorder %s23, 1
          %s410 = scalar_select %p409, %s23, 1
          %s411 = smul.addr %s410, 4
          %s412 = smul.addr %s411, 8
          %s413 = scalar_lea.vmem %s0, %s412
        $region72: #{tpu_custom_call.1} parent=67 // pred_fallthru
          _
      $region68: #{tpu_custom_call.1} parent=5 // pred_fallthru
        _
      %p414 = scmp.le.s32.totalorder 1, %s23
      %p415 = scmp.lt.s32.totalorder %s23, 3
      %p416 = pnand %p414, %p415
      %p417 = pneg %p416
      // Predicated region
      $region73: #{tpu_custom_call.1} parent=5 // pred_check
        _
      $region74: #{tpu_custom_call.1} parent=5 // pred_check_branch
        %419 = sbr.rel (%p416) target = $region76
      $region75: #{tpu_custom_call.1} parent=5 // pred_region
        %s420 = ssub.s32 %s23, 1
        %p421 = scmp.lt.s32.totalorder %s28, 1
        %s422 = scalar_select %p421, %s28, 1
        %s423 = smul.addr %s422, 4
        %s424 = smul.addr %s423, 8
        %s425 = scalar_lea.vmem %s0, %s424
        %p426 = pneg %p49
        %p427 = pneg %p46
        %p428 = pneg %p70
        %p429 = pneg %p67
        %p430 = pneg %p91
        %p431 = pneg %p88
        %p432 = pneg %p112
        %p433 = pneg %p109
        %p434 = pneg %p133
        %p435 = pneg %p130
        %p436 = pneg %p154
        %p437 = pneg %p151
        %p438 = pneg %p175
        %p439 = pneg %p172
        %p440 = pneg %p196
        %p441 = pneg %p193
        %p442 = pneg %p217
        %p443 = pneg %p214
        %p444 = pneg %p238
        %p445 = pneg %p235
        %p446 = pneg %p259
        %p447 = pneg %p256
        %p448 = pneg %p280
        %p449 = pneg %p277
        %p450 = pneg %p301
        %p451 = pneg %p298
        %p452 = pneg %p322
        %p453 = pneg %p319
        %p454 = pneg %p348
        %p455 = pneg %p345
        %s456 = sand.u32 %s335, 1
        %s457 = scalar_lea.sflag [#allocation3], %s456
        %s458 = sand.u32 %s335, 1
        %s459 = smul.addr %s458, 32
        %s460 = scalar_lea.vmem [#allocation2], %s459
        %p461 = scmp.lt.s32.totalorder %s28, 1
        %s462 = scalar_select %p461, %s28, 1
        %s463 = smul.addr %s462, 4
        %s464 = smul.addr %s463, 8
        %s465 = scalar_lea.vmem %s0, %s464
        %v467 = vld [vmem:[%s465] sm:$0xff]
        %v468 = vld [vmem:[%s465 + $0x8] sm:$0xff]
        %v469 = vld [vmem:[%s465 + $0x10] sm:$0xff]
        %v470 = vld [vmem:[%s465 + $0x18] sm:$0xff]
        %v471 = vadd.f32 %v467, %v468
        %472 = vadd.xlane.f32.xlu0 %v471
        %v473 = vpop.xlane.xlu0 %472
        %v474 = vadd.f32 %v469, %v470
        %475 = vadd.xlane.f32.xlu0 %v474
        %v476 = vpop.xlane.xlu0 %475
        %v477 = vrcp.pop 256.0
        %v478 = vmul.f32 256.0, %v477
        %v479 = vsub.f32 1.0, %v478
        %v480 = vmul.f32 %v477, %v479
        %v481 = vadd.f32 %v477, %v480
        %vm482 = vweird.f32 %v477
        %v483 = vsel %vm482, %v477, %v481
        %v484 = vmul.f32 %v473, %v483
        %v485 = vmul.f32 %v476, %v483
        %v486 = vld [vmem:[%s1] sm:$0xff]
        %v487 = vld [vmem:[%s1 + $0x8] sm:$0xff]
        %v488 = vmul.f32 %v486, %v484
        %v489 = vmul.f32 %v487, %v485
        %vm490 = vcmask 130048
        %v491 = vsel %vm490, %v488, 0.0
        %v492 = vsel %vm490, %v489, 0.0
        %v493 = vadd.f32 %v491, %v492
        %v494 = vrot.slane %v493, 4
        %v495 = vadd.f32 %v493, %v494
        %v496 = vrot.slane %v495, 2
        %v497 = vadd.f32 %v495, %v496
        %v498 = vrot.slane %v497, 1
        %v499 = vadd.f32 %v497, %v498
        %v500 = vld [vmem:[%s2] sm:$0x1]
        %v501 = vadd.f32 %v499, %v500
        %v502 = vmul.f32 %v501, 0.5
        %v503 = vtanh.pop %v502
        %v504 = vmul.f32 %v503, 0.5
        %v505 = vadd.f32 %v504, 0.5
        %v506 = vmul.f32 %v501, %v505
        %v507 = vpack.c.bf16 %v506, %v506
        %v508 = vld [vmem:[%s3] sm:$0xf]
        %v509 = vld [vmem:[%s3 + $0x4] sm:$0xf]
        %v510 = vld [vmem:[%s4] sm:$0x1]
        %v513 = vunpack.c.l.b16 %v508
        %v514 = vunpack.c.l.b16 %v509
        %v515 = vpack.c.b16 %v514, %v513
        %v518 = vsel %vm490, %v507, 0
        %520 = vmatpush.bf16.msra.mxu0 0
        %521 = vmatpush.bf16.msra.mxu0 0
        %522 = vmatpush.bf16.msra.mxu0 0
        %523 = vmatpush.bf16.msra.mxu0 0
        %524 = vmatpush.bf16.msra.mxu0 0
        %525 = vmatpush.bf16.msra.mxu0 0
        %526 = vmatpush.bf16.msra.mxu0 0
        %527 = vmatpush.bf16.msra.mxu0 %v515
        %528 = vmatmul.bf16.gmra.mxu0 %v518
        %v529 = vpop.f32.mrf.mxu0
        %v530 = vadd.f32 %v510, %v529
        %v531 = vpop.f32.mrf.mxu0
        %532 = vdwg.mxu0
        %v533 = vmul.f32 %v530, 0.5
        %v534 = vtanh.pop %v533
        %v535 = vmul.f32 %v534, 0.5
        %v536 = vadd.f32 %v535, 0.5
        %v537 = vmul.f32 %v530, %v536
        %v538 = vld [vmem:[%s5] sm:$0xff]
        %v539 = vld [vmem:[%s5 + $0x8] sm:$0xff]
        %v540 = vperm.slane %v537, 0
        %v541 = vmul.f32 %v538, %v540
        %v542 = vmul.f32 %v539, %v540
        %v543 = vpack.c.bf16 %v542, %v541
        %v544 = vpack.c.bf16 %v469, %v467
        %v545 = vpack.c.bf16 %v470, %v468
        %v546 = vld [vmem:[%s6] sm:$0xff]
        %v547 = vld [vmem:[%s6 + $0x8] sm:$0xff]
        %549 = vset.pattern.permute.xlu0 0
        %550 = vperm.xlu0 %549, %v546
        %v551 = vpop.permute.xlu0 %550
        %554 = vset.pattern.permute.xlu0 0
        %555 = vperm.xlu0 %554, %v547
        %v556 = vpop.permute.xlu0 %555
        %v559 = vsel %vm490, %v543, 0
        %561 = vmatpush.bf16.msra.mxu0 0
        %562 = vmatpush.bf16.msra.mxu0 0
        %563 = vmatpush.bf16.msra.mxu0 0
        %564 = vmatpush.bf16.msra.mxu0 0
        %565 = vmatpush.bf16.msra.mxu0 0
        %566 = vmatpush.bf16.msra.mxu0 0
        %567 = vmatpush.bf16.msra.mxu0 0
        %568 = vmatpush.bf16.msra.mxu0 %v544
        %569 = vmatmul.bf16.gmra.mxu0 %v559
        %v570 = vpop.f32.mrf.mxu0
        %v571 = vadd.f32 %v551, %v570
        %v572 = vpop.f32.mrf.mxu0
        %v573 = vadd.f32 %v556, %v572
        %574 = vdwg.mxu0
        %575 = vmatpush.bf16.msra.mxu0 0
        %576 = vmatpush.bf16.msra.mxu0 0
        %577 = vmatpush.bf16.msra.mxu0 0
        %578 = vmatpush.bf16.msra.mxu0 0
        %579 = vmatpush.bf16.msra.mxu0 0
        %580 = vmatpush.bf16.msra.mxu0 0
        %581 = vmatpush.bf16.msra.mxu0 0
        %582 = vmatpush.bf16.msra.mxu0 %v545
        %583 = vmatmul.bf16.gmra.mxu0 %v559
        %v584 = vpop.f32.mrf.mxu0
        %v585 = vadd.f32 %v551, %v584
        %v586 = vpop.f32.mrf.mxu0
        %v587 = vadd.f32 %v556, %v586
        %588 = vdwg.mxu0
        %v589 = vmul.f32 %v571, 0.5
        %v590 = vmul.f32 %v585, 0.5
        %v591 = vmul.f32 %v573, 0.5
        %v592 = vmul.f32 %v587, 0.5
        %v593 = vtanh.pop %v589
        %v594 = vtanh.pop %v590
        %v595 = vtanh.pop %v591
        %v596 = vtanh.pop %v592
        %v597 = vmul.f32 %v593, 0.5
        %v598 = vmul.f32 %v594, 0.5
        %v599 = vmul.f32 %v595, 0.5
        %v600 = vmul.f32 %v596, 0.5
        %v601 = vadd.f32 %v597, 0.5
        %v602 = vadd.f32 %v598, 0.5
        %v603 = vadd.f32 %v599, 0.5
        %v604 = vadd.f32 %v600, 0.5
        %v605 = vmul.f32 %v571, %v601
        %v606 = vmul.f32 %v585, %v602
        %v607 = vmul.f32 %v573, %v603
        %v608 = vmul.f32 %v587, %v604
        %v609 = vlaneseq
        %v610 = vand.u32 %v609, 127
        %v611 = vadd.s32 %v610, 128
        %vm612 = vcmp.lt.s32.totalorder %v610, 0
        %v613 = vsub.s32 0, %v610
        %v614 = vsel %vm612, %v613, %v610
        %v615 = vshrl.u32 %v614, 4
        %v616 = vand.u32 %v614, 15
        %v617 = vsub.s32 0, %v616
        %v618 = vsel %vm612, %v617, %v616
        %vm619 = vcmp.lt.s32.totalorder %v611, 0
        %v620 = vsub.s32 0, %v611
        %v621 = vsel %vm619, %v620, %v611
        %v622 = vshrl.u32 %v621, 4
        %v623 = vand.u32 %v621, 15
        %v624 = vsub.s32 0, %v623
        %v625 = vsel %vm619, %v624, %v623
        %vm626 = vcmp.ne.s32.totalorder %v618, 0
        %vm627 = vcmp.ne.s32.totalorder %v625, 0
        %vm628 = vcmp.lt.s32.totalorder %v618, 0
        %vm629 = vcmp.lt.s32.totalorder %v625, 0
        %vm630 = vmand %vm628, %vm626
        %vm631 = vmand %vm629, %vm627
        %v632 = vadd.s32 %v618, 16
        %v633 = vadd.s32 %v625, 16
        %v634 = vsel %vm630, %v632, %v618
        %v635 = vsel %vm631, %v633, %v625
        %vm636 = vcmp.ge.s32.totalorder %v634, 1
        %vm637 = vcmp.ge.s32.totalorder %v635, 1
        %vm638 = vcmp.le.s32.totalorder %v634, 14
        %vm639 = vcmp.le.s32.totalorder %v635, 14
        %vm640 = vcmp.ge.s32.totalorder %v610, 16
        %vm641 = vcmp.ge.s32.totalorder %v611, 16
        %vm642 = vcmp.lt.s32.totalorder %v610, 240
        %vm643 = vcmp.lt.s32.totalorder %v611, 240
        %vm644 = vmand %vm640, %vm636
        %vm645 = vmand %vm641, %vm637
        %vm646 = vmand %vm640, %vm638
        %vm647 = vmand %vm641, %vm639
        %vm648 = vmand %vm642, %vm636
        %vm649 = vmand %vm643, %vm637
        %vm650 = vmand %vm642, %vm638
        %vm651 = vmand %vm643, %vm639
        %652 = vrot.lane.b32.xlu0 %v605, 17
        %v653 = vpop.permute.xlu0 %652
        %654 = vrot.lane.b32.xlu0 %v606, 17
        %v655 = vpop.permute.xlu0 %654
        %vm656 = vcmp.lt.s32.totalorder %v610, 17
        %v657 = vsel %vm656, %v653, %v655
        %v658 = vsel %vm656, %v655, %v653
        %v659 = vsel %vm644, 1, 0
        %v660 = vsel %vm645, 1, 0
        %vm661 = vcmp.eq.s32.totalorder %v659, 1
        %vm662 = vcmp.eq.s32.totalorder %v660, 1
        %v663 = vsel %vm661, %v658, 0.0
        %v664 = vsel %vm662, %v657, 0.0
        %v665 = vld [vmem:[%s7] sm:$0xf]
        %v666 = vpack.c.bf16 %v663, %v663
        %v667 = vpack.c.bf16 %v664, %v664
        %668 = vrot.lane.b32.xlu0 %v605, 16
        %v669 = vpop.permute.xlu0 %668
        %670 = vrot.lane.b32.xlu0 %v606, 16
        %v671 = vpop.permute.xlu0 %670
        %vm672 = vcmp.lt.s32.totalorder %v610, 16
        %v673 = vsel %vm672, %v669, %v671
        %v674 = vsel %vm672, %v671, %v669
        %v675 = vsel %vm640, 1, 0
        %v676 = vsel %vm641, 1, 0
        %vm677 = vcmp.eq.s32.totalorder %v675, 1
        %vm678 = vcmp.eq.s32.totalorder %v676, 1
        %v679 = vsel %vm677, %v674, 0.0
        %v680 = vsel %vm678, %v673, 0.0
        %s681 = scalar_lea.vmem %s7, 4
        %v682 = vld [vmem:[%s681] sm:$0xf]
        %v683 = vpack.c.bf16 %v679, %v679
        %v684 = vpack.c.bf16 %v680, %v680
        %vm685 = vcmask 64512
        %v687 = vsel %vm685, %v682, 0
        %vm689 = vcmask 1043456
        %v691 = vsel %vm689, %v683, 0
        %v694 = vsel %vm689, %v684, 0
        %696 = vmatpush.bf16.msra.mxu0 0
        %697 = vmatpush.bf16.msra.mxu0 0
        %698 = vmatpush.bf16.msra.mxu0 0
        %699 = vmatpush.bf16.msra.mxu0 0
        %700 = vmatpush.bf16.msra.mxu0 0
        %701 = vmatpush.bf16.msra.mxu0 0
        %702 = vmatpush.bf16.msra.mxu0 0
        %703 = vmatpush.bf16.msra.mxu0 %v691
        %704 = vmatmul.bf16.gmra.mxu0 %v687
        %v705 = vpop.f32.mrf.mxu0
        %v706 = vadd.f32 0.0, %v705
        %v707 = vpop.f32.mrf.mxu0
        %708 = vdwg.mxu0
        %709 = vmatpush.bf16.msra.mxu0 0
        %710 = vmatpush.bf16.msra.mxu0 0
        %711 = vmatpush.bf16.msra.mxu0 0
        %712 = vmatpush.bf16.msra.mxu0 0
        %713 = vmatpush.bf16.msra.mxu0 0
        %714 = vmatpush.bf16.msra.mxu0 0
        %715 = vmatpush.bf16.msra.mxu0 0
        %716 = vmatpush.bf16.msra.mxu0 %v694
        %717 = vmatmul.bf16.gmra.mxu0 %v687
        %v718 = vpop.f32.mrf.mxu0
        %v719 = vadd.f32 0.0, %v718
        %v720 = vpop.f32.mrf.mxu0
        %721 = vdwg.mxu0
        %v723 = vsel %vm685, %v665, 0
        %v726 = vsel %vm689, %v666, 0
        %v729 = vsel %vm689, %v667, 0
        %731 = vmatpush.bf16.msra.mxu0 0
        %732 = vmatpush.bf16.msra.mxu0 0
        %733 = vmatpush.bf16.msra.mxu0 0
        %734 = vmatpush.bf16.msra.mxu0 0
        %735 = vmatpush.bf16.msra.mxu0 0
        %736 = vmatpush.bf16.msra.mxu0 0
        %737 = vmatpush.bf16.msra.mxu0 0
        %738 = vmatpush.bf16.msra.mxu0 %v726
        %739 = vmatmul.bf16.gmra.mxu0 %v723
        %v740 = vpop.f32.mrf.mxu0
        %v741 = vadd.f32 %v706, %v740
        %v742 = vpop.f32.mrf.mxu0
        %743 = vdwg.mxu0
        %744 = vmatpush.bf16.msra.mxu0 0
        %745 = vmatpush.bf16.msra.mxu0 0
        %746 = vmatpush.bf16.msra.mxu0 0
        %747 = vmatpush.bf16.msra.mxu0 0
        %748 = vmatpush.bf16.msra.mxu0 0
        %749 = vmatpush.bf16.msra.mxu0 0
        %750 = vmatpush.bf16.msra.mxu0 0
        %751 = vmatpush.bf16.msra.mxu0 %v729
        %752 = vmatmul.bf16.gmra.mxu0 %v723
        %v753 = vpop.f32.mrf.mxu0
        %v754 = vadd.f32 %v719, %v753
        %v755 = vpop.f32.mrf.mxu0
        %756 = vdwg.mxu0
        %757 = vrot.lane.b32.xlu0 %v605, 15
        %v758 = vpop.permute.xlu0 %757
        %759 = vrot.lane.b32.xlu0 %v606, 15
        %v760 = vpop.permute.xlu0 %759
        %vm761 = vcmp.lt.s32.totalorder %v610, 15
        %v762 = vsel %vm761, %v758, %v760
        %v763 = vsel %vm761, %v760, %v758
        %v764 = vsel %vm646, 1, 0
        %v765 = vsel %vm647, 1, 0
        %vm766 = vcmp.eq.s32.totalorder %v764, 1
        %vm767 = vcmp.eq.s32.totalorder %v765, 1
        %v768 = vsel %vm766, %v763, 0.0
        %v769 = vsel %vm767, %v762, 0.0
        %s770 = scalar_lea.vmem %s7, 8
        %v771 = vld [vmem:[%s770] sm:$0xf]
        %v772 = vpack.c.bf16 %v768, %v768
        %v773 = vpack.c.bf16 %v769, %v769
        %v775 = vsel %vm685, %v771, 0
        %v778 = vsel %vm689, %v772, 0
        %v781 = vsel %vm689, %v773, 0
        %783 = vmatpush.bf16.msra.mxu0 0
        %784 = vmatpush.bf16.msra.mxu0 0
        %785 = vmatpush.bf16.msra.mxu0 0
        %786 = vmatpush.bf16.msra.mxu0 0
        %787 = vmatpush.bf16.msra.mxu0 0
        %788 = vmatpush.bf16.msra.mxu0 0
        %789 = vmatpush.bf16.msra.mxu0 0
        %790 = vmatpush.bf16.msra.mxu0 %v778
        %791 = vmatmul.bf16.gmra.mxu0 %v775
        %v792 = vpop.f32.mrf.mxu0
        %v793 = vadd.f32 0.0, %v792
        %v794 = vpop.f32.mrf.mxu0
        %795 = vdwg.mxu0
        %796 = vmatpush.bf16.msra.mxu0 0
        %797 = vmatpush.bf16.msra.mxu0 0
        %798 = vmatpush.bf16.msra.mxu0 0
        %799 = vmatpush.bf16.msra.mxu0 0
        %800 = vmatpush.bf16.msra.mxu0 0
        %801 = vmatpush.bf16.msra.mxu0 0
        %802 = vmatpush.bf16.msra.mxu0 0
        %803 = vmatpush.bf16.msra.mxu0 %v781
        %804 = vmatmul.bf16.gmra.mxu0 %v775
        %v805 = vpop.f32.mrf.mxu0
        %v806 = vadd.f32 0.0, %v805
        %v807 = vpop.f32.mrf.mxu0
        %808 = vdwg.mxu0
        %v809 = vadd.f32 %v741, %v793
        %v810 = vadd.f32 %v754, %v806
        %811 = vrot.lane.b32.xlu0 %v605, 1
        %v812 = vpop.permute.xlu0 %811
        %813 = vrot.lane.b32.xlu0 %v606, 1
        %v814 = vpop.permute.xlu0 %813
        %vm815 = vcmp.lt.s32.totalorder %v610, 1
        %v816 = vsel %vm815, %v812, %v814
        %v817 = vsel %vm815, %v814, %v812
        %v818 = vsel %vm636, 1, 0
        %v819 = vsel %vm637, 1, 0
        %vm820 = vcmp.eq.s32.totalorder %v818, 1
        %vm821 = vcmp.eq.s32.totalorder %v819, 1
        %v822 = vsel %vm820, %v817, 0.0
        %v823 = vsel %vm821, %v816, 0.0
        %s824 = scalar_lea.vmem %s7, 12
        %v825 = vld [vmem:[%s824] sm:$0xf]
        %v826 = vpack.c.bf16 %v822, %v822
        %v827 = vpack.c.bf16 %v823, %v823
        %v829 = vsel %vm685, %v825, 0
        %v832 = vsel %vm689, %v826, 0
        %v835 = vsel %vm689, %v827, 0
        %837 = vmatpush.bf16.msra.mxu0 0
        %838 = vmatpush.bf16.msra.mxu0 0
        %839 = vmatpush.bf16.msra.mxu0 0
        %840 = vmatpush.bf16.msra.mxu0 0
        %841 = vmatpush.bf16.msra.mxu0 0
        %842 = vmatpush.bf16.msra.mxu0 0
        %843 = vmatpush.bf16.msra.mxu0 0
        %844 = vmatpush.bf16.msra.mxu0 %v832
        %845 = vmatmul.bf16.gmra.mxu0 %v829
        %v846 = vpop.f32.mrf.mxu0
        %v847 = vadd.f32 0.0, %v846
        %v848 = vpop.f32.mrf.mxu0
        %849 = vdwg.mxu0
        %850 = vmatpush.bf16.msra.mxu0 0
        %851 = vmatpush.bf16.msra.mxu0 0
        %852 = vmatpush.bf16.msra.mxu0 0
        %853 = vmatpush.bf16.msra.mxu0 0
        %854 = vmatpush.bf16.msra.mxu0 0
        %855 = vmatpush.bf16.msra.mxu0 0
        %856 = vmatpush.bf16.msra.mxu0 0
        %857 = vmatpush.bf16.msra.mxu0 %v835
        %858 = vmatmul.bf16.gmra.mxu0 %v829
        %v859 = vpop.f32.mrf.mxu0
        %v860 = vadd.f32 0.0, %v859
        %v861 = vpop.f32.mrf.mxu0
        %862 = vdwg.mxu0
        %v863 = vadd.f32 %v809, %v847
        %v864 = vadd.f32 %v810, %v860
        %s865 = scalar_lea.vmem %s7, 16
        %v866 = vld [vmem:[%s865] sm:$0xf]
        %v867 = vpack.c.bf16 %v605, %v605
        %v868 = vpack.c.bf16 %v606, %v606
        %v870 = vsel %vm685, %v866, 0
        %v873 = vsel %vm689, %v867, 0
        %v876 = vsel %vm689, %v868, 0
        %878 = vmatpush.bf16.msra.mxu0 0
        %879 = vmatpush.bf16.msra.mxu0 0
        %880 = vmatpush.bf16.msra.mxu0 0
        %881 = vmatpush.bf16.msra.mxu0 0
        %882 = vmatpush.bf16.msra.mxu0 0
        %883 = vmatpush.bf16.msra.mxu0 0
        %884 = vmatpush.bf16.msra.mxu0 0
        %885 = vmatpush.bf16.msra.mxu0 %v873
        %886 = vmatmul.bf16.gmra.mxu0 %v870
        %v887 = vpop.f32.mrf.mxu0
        %v888 = vadd.f32 0.0, %v887
        %v889 = vpop.f32.mrf.mxu0
        %890 = vdwg.mxu0
        %891 = vmatpush.bf16.msra.mxu0 0
        %892 = vmatpush.bf16.msra.mxu0 0
        %893 = vmatpush.bf16.msra.mxu0 0
        %894 = vmatpush.bf16.msra.mxu0 0
        %895 = vmatpush.bf16.msra.mxu0 0
        %896 = vmatpush.bf16.msra.mxu0 0
        %897 = vmatpush.bf16.msra.mxu0 0
        %898 = vmatpush.bf16.msra.mxu0 %v876
        %899 = vmatmul.bf16.gmra.mxu0 %v870
        %v900 = vpop.f32.mrf.mxu0
        %v901 = vadd.f32 0.0, %v900
        %v902 = vpop.f32.mrf.mxu0
        %903 = vdwg.mxu0
        %v904 = vadd.f32 %v863, %v888
        %v905 = vadd.f32 %v864, %v901
        %906 = vrot.lane.b32.xlu0 %v605, 127
        %v907 = vpop.permute.xlu0 %906
        %908 = vrot.lane.b32.xlu0 %v606, 127
        %v909 = vpop.permute.xlu0 %908
        %vm910 = vcmp.lt.s32.totalorder %v610, 127
        %v911 = vsel %vm910, %v907, %v909
        %v912 = vsel %vm910, %v909, %v907
        %v913 = vsel %vm638, 1, 0
        %v914 = vsel %vm639, 1, 0
        %vm915 = vcmp.eq.s32.totalorder %v913, 1
        %vm916 = vcmp.eq.s32.totalorder %v914, 1
        %v917 = vsel %vm915, %v911, 0.0
        %v918 = vsel %vm916, %v912, 0.0
        %s919 = scalar_lea.vmem %s7, 20
        %v920 = vld [vmem:[%s919] sm:$0xf]
        %v921 = vpack.c.bf16 %v917, %v917
        %v922 = vpack.c.bf16 %v918, %v918
        %v924 = vsel %vm685, %v920, 0
        %v927 = vsel %vm689, %v921, 0
        %v930 = vsel %vm689, %v922, 0
        %932 = vmatpush.bf16.msra.mxu0 0
        %933 = vmatpush.bf16.msra.mxu0 0
        %934 = vmatpush.bf16.msra.mxu0 0
        %935 = vmatpush.bf16.msra.mxu0 0
        %936 = vmatpush.bf16.msra.mxu0 0
        %937 = vmatpush.bf16.msra.mxu0 0
        %938 = vmatpush.bf16.msra.mxu0 0
        %939 = vmatpush.bf16.msra.mxu0 %v927
        %940 = vmatmul.bf16.gmra.mxu0 %v924
        %v941 = vpop.f32.mrf.mxu0
        %v942 = vadd.f32 0.0, %v941
        %v943 = vpop.f32.mrf.mxu0
        %944 = vdwg.mxu0
        %945 = vmatpush.bf16.msra.mxu0 0
        %946 = vmatpush.bf16.msra.mxu0 0
        %947 = vmatpush.bf16.msra.mxu0 0
        %948 = vmatpush.bf16.msra.mxu0 0
        %949 = vmatpush.bf16.msra.mxu0 0
        %950 = vmatpush.bf16.msra.mxu0 0
        %951 = vmatpush.bf16.msra.mxu0 0
        %952 = vmatpush.bf16.msra.mxu0 %v930
        %953 = vmatmul.bf16.gmra.mxu0 %v924
        %v954 = vpop.f32.mrf.mxu0
        %v955 = vadd.f32 0.0, %v954
        %v956 = vpop.f32.mrf.mxu0
        %957 = vdwg.mxu0
        %v958 = vadd.f32 %v904, %v942
        %v959 = vadd.f32 %v905, %v955
        %960 = vrot.lane.b32.xlu0 %v605, 113
        %v961 = vpop.permute.xlu0 %960
        %962 = vrot.lane.b32.xlu0 %v606, 113
        %v963 = vpop.permute.xlu0 %962
        %vm964 = vcmp.lt.s32.totalorder %v610, 113
        %v965 = vsel %vm964, %v961, %v963
        %v966 = vsel %vm964, %v963, %v961
        %v967 = vsel %vm648, 1, 0
        %v968 = vsel %vm649, 1, 0
        %vm969 = vcmp.eq.s32.totalorder %v967, 1
        %vm970 = vcmp.eq.s32.totalorder %v968, 1
        %v971 = vsel %vm969, %v965, 0.0
        %v972 = vsel %vm970, %v966, 0.0
        %s973 = scalar_lea.vmem %s7, 24
        %v974 = vld [vmem:[%s973] sm:$0xf]
        %v975 = vpack.c.bf16 %v971, %v971
        %v976 = vpack.c.bf16 %v972, %v972
        %v978 = vsel %vm685, %v974, 0
        %v981 = vsel %vm689, %v975, 0
        %v984 = vsel %vm689, %v976, 0
        %986 = vmatpush.bf16.msra.mxu0 0
        %987 = vmatpush.bf16.msra.mxu0 0
        %988 = vmatpush.bf16.msra.mxu0 0
        %989 = vmatpush.bf16.msra.mxu0 0
        %990 = vmatpush.bf16.msra.mxu0 0
        %991 = vmatpush.bf16.msra.mxu0 0
        %992 = vmatpush.bf16.msra.mxu0 0
        %993 = vmatpush.bf16.msra.mxu0 %v981
        %994 = vmatmul.bf16.gmra.mxu0 %v978
        %v995 = vpop.f32.mrf.mxu0
        %v996 = vadd.f32 0.0, %v995
        %v997 = vpop.f32.mrf.mxu0
        %998 = vdwg.mxu0
        %999 = vmatpush.bf16.msra.mxu0 0
        %1000 = vmatpush.bf16.msra.mxu0 0
        %1001 = vmatpush.bf16.msra.mxu0 0
        %1002 = vmatpush.bf16.msra.mxu0 0
        %1003 = vmatpush.bf16.msra.mxu0 0
        %1004 = vmatpush.bf16.msra.mxu0 0
        %1005 = vmatpush.bf16.msra.mxu0 0
        %1006 = vmatpush.bf16.msra.mxu0 %v984
        %1007 = vmatmul.bf16.gmra.mxu0 %v978
        %v1008 = vpop.f32.mrf.mxu0
        %v1009 = vadd.f32 0.0, %v1008
        %v1010 = vpop.f32.mrf.mxu0
        %1011 = vdwg.mxu0
        %v1012 = vadd.f32 %v958, %v996
        %v1013 = vadd.f32 %v959, %v1009
        %1014 = vrot.lane.b32.xlu0 %v605, 112
        %v1015 = vpop.permute.xlu0 %1014
        %1016 = vrot.lane.b32.xlu0 %v606, 112
        %v1017 = vpop.permute.xlu0 %1016
        %vm1018 = vcmp.lt.s32.totalorder %v610, 112
        %v1019 = vsel %vm1018, %v1015, %v1017
        %v1020 = vsel %vm1018, %v1017, %v1015
        %v1021 = vsel %vm642, 1, 0
        %v1022 = vsel %vm643, 1, 0
        %vm1023 = vcmp.eq.s32.totalorder %v1021, 1
        %vm1024 = vcmp.eq.s32.totalorder %v1022, 1
        %v1025 = vsel %vm1023, %v1019, 0.0
        %v1026 = vsel %vm1024, %v1020, 0.0
        %s1027 = scalar_lea.vmem %s7, 28
        %v1028 = vld [vmem:[%s1027] sm:$0xf]
        %v1029 = vpack.c.bf16 %v1025, %v1025
        %v1030 = vpack.c.bf16 %v1026, %v1026
        %v1032 = vsel %vm685, %v1028, 0
        %v1035 = vsel %vm689, %v1029, 0
        %v1038 = vsel %vm689, %v1030, 0
        %1040 = vmatpush.bf16.msra.mxu0 0
        %1041 = vmatpush.bf16.msra.mxu0 0
        %1042 = vmatpush.bf16.msra.mxu0 0
        %1043 = vmatpush.bf16.msra.mxu0 0
        %1044 = vmatpush.bf16.msra.mxu0 0
        %1045 = vmatpush.bf16.msra.mxu0 0
        %1046 = vmatpush.bf16.msra.mxu0 0
        %1047 = vmatpush.bf16.msra.mxu0 %v1035
        %1048 = vmatmul.bf16.gmra.mxu0 %v1032
        %v1049 = vpop.f32.mrf.mxu0
        %v1050 = vadd.f32 0.0, %v1049
        %v1051 = vpop.f32.mrf.mxu0
        %1052 = vdwg.mxu0
        %1053 = vmatpush.bf16.msra.mxu0 0
        %1054 = vmatpush.bf16.msra.mxu0 0
        %1055 = vmatpush.bf16.msra.mxu0 0
        %1056 = vmatpush.bf16.msra.mxu0 0
        %1057 = vmatpush.bf16.msra.mxu0 0
        %1058 = vmatpush.bf16.msra.mxu0 0
        %1059 = vmatpush.bf16.msra.mxu0 0
        %1060 = vmatpush.bf16.msra.mxu0 %v1038
        %1061 = vmatmul.bf16.gmra.mxu0 %v1032
        %v1062 = vpop.f32.mrf.mxu0
        %v1063 = vadd.f32 0.0, %v1062
        %v1064 = vpop.f32.mrf.mxu0
        %1065 = vdwg.mxu0
        %v1066 = vadd.f32 %v1012, %v1050
        %v1067 = vadd.f32 %v1013, %v1063
        %1068 = vrot.lane.b32.xlu0 %v605, 111
        %v1069 = vpop.permute.xlu0 %1068
        %1070 = vrot.lane.b32.xlu0 %v606, 111
        %v1071 = vpop.permute.xlu0 %1070
        %vm1072 = vcmp.lt.s32.totalorder %v610, 111
        %v1073 = vsel %vm1072, %v1069, %v1071
        %v1074 = vsel %vm1072, %v1071, %v1069
        %v1075 = vsel %vm650, 1, 0
        %v1076 = vsel %vm651, 1, 0
        %vm1077 = vcmp.eq.s32.totalorder %v1075, 1
        %vm1078 = vcmp.eq.s32.totalorder %v1076, 1
        %v1079 = vsel %vm1077, %v1073, 0.0
        %v1080 = vsel %vm1078, %v1074, 0.0
        %s1081 = scalar_lea.vmem %s7, 32
        %v1082 = vld [vmem:[%s1081] sm:$0xf]
        %v1083 = vpack.c.bf16 %v1079, %v1079
        %v1084 = vpack.c.bf16 %v1080, %v1080
        %v1086 = vsel %vm685, %v1082, 0
        %v1089 = vsel %vm689, %v1083, 0
        %v1092 = vsel %vm689, %v1084, 0
        %1094 = vmatpush.bf16.msra.mxu0 0
        %1095 = vmatpush.bf16.msra.mxu0 0
        %1096 = vmatpush.bf16.msra.mxu0 0
        %1097 = vmatpush.bf16.msra.mxu0 0
        %1098 = vmatpush.bf16.msra.mxu0 0
        %1099 = vmatpush.bf16.msra.mxu0 0
        %1100 = vmatpush.bf16.msra.mxu0 0
        %1101 = vmatpush.bf16.msra.mxu0 %v1089
        %1102 = vmatmul.bf16.gmra.mxu0 %v1086
        %v1103 = vpop.f32.mrf.mxu0
        %v1104 = vadd.f32 0.0, %v1103
        %v1105 = vpop.f32.mrf.mxu0
        %1106 = vdwg.mxu0
        %1107 = vmatpush.bf16.msra.mxu0 0
        %1108 = vmatpush.bf16.msra.mxu0 0
        %1109 = vmatpush.bf16.msra.mxu0 0
        %1110 = vmatpush.bf16.msra.mxu0 0
        %1111 = vmatpush.bf16.msra.mxu0 0
        %1112 = vmatpush.bf16.msra.mxu0 0
        %1113 = vmatpush.bf16.msra.mxu0 0
        %1114 = vmatpush.bf16.msra.mxu0 %v1092
        %1115 = vmatmul.bf16.gmra.mxu0 %v1086
        %v1116 = vpop.f32.mrf.mxu0
        %v1117 = vadd.f32 0.0, %v1116
        %v1118 = vpop.f32.mrf.mxu0
        %1119 = vdwg.mxu0
        %v1120 = vadd.f32 %v1066, %v1104
        %v1121 = vadd.f32 %v1067, %v1117
        %v1122 = vld [vmem:[%s8] sm:$0xff]
        %1124 = vset.pattern.permute.xlu0 0
        %1125 = vperm.xlu0 %1124, %v1122
        %v1126 = vpop.permute.xlu0 %1125
        %v1128 = vadd.f32 %v1120, %v1126
        %v1129 = vadd.f32 %v1121, %v1126
        %v1130 = vmul.f32 %v1128, 0.5
        %v1131 = vmul.f32 %v1129, 0.5
        %v1132 = vtanh.pop %v1130
        %v1133 = vtanh.pop %v1131
        %v1134 = vmul.f32 %v1132, 0.5
        %v1135 = vmul.f32 %v1133, 0.5
        %v1136 = vadd.f32 %v1134, 0.5
        %v1137 = vadd.f32 %v1135, 0.5
        %v1138 = vmul.f32 %v1128, %v1136
        %v1139 = vmul.f32 %v1129, %v1137
        %1140 = vrot.lane.b32.xlu0 %v1138, 17
        %v1141 = vpop.permute.xlu0 %1140
        %1142 = vrot.lane.b32.xlu0 %v1139, 17
        %v1143 = vpop.permute.xlu0 %1142
        %v1144 = vsel %vm656, %v1141, %v1143
        %v1145 = vsel %vm656, %v1143, %v1141
        %v1146 = vsel %vm661, %v1145, 0.0
        %v1147 = vsel %vm662, %v1144, 0.0
        %v1148 = vld [vmem:[%s9] sm:$0xf]
        %v1149 = vpack.c.bf16 %v1146, %v1146
        %v1150 = vpack.c.bf16 %v1147, %v1147
        %1151 = vrot.lane.b32.xlu0 %v1138, 16
        %v1152 = vpop.permute.xlu0 %1151
        %1153 = vrot.lane.b32.xlu0 %v1139, 16
        %v1154 = vpop.permute.xlu0 %1153
        %v1155 = vsel %vm672, %v1152, %v1154
        %v1156 = vsel %vm672, %v1154, %v1152
        %v1157 = vsel %vm677, %v1156, 0.0
        %v1158 = vsel %vm678, %v1155, 0.0
        %s1159 = scalar_lea.vmem %s9, 4
        %v1160 = vld [vmem:[%s1159] sm:$0xf]
        %v1161 = vpack.c.bf16 %v1157, %v1157
        %v1162 = vpack.c.bf16 %v1158, %v1158
        %v1164 = vsel %vm685, %v1160, 0
        %v1167 = vsel %vm689, %v1161, 0
        %v1170 = vsel %vm689, %v1162, 0
        %1172 = vmatpush.bf16.msra.mxu0 0
        %1173 = vmatpush.bf16.msra.mxu0 0
        %1174 = vmatpush.bf16.msra.mxu0 0
        %1175 = vmatpush.bf16.msra.mxu0 0
        %1176 = vmatpush.bf16.msra.mxu0 0
        %1177 = vmatpush.bf16.msra.mxu0 0
        %1178 = vmatpush.bf16.msra.mxu0 0
        %1179 = vmatpush.bf16.msra.mxu0 %v1167
        %1180 = vmatmul.bf16.gmra.mxu0 %v1164
        %v1181 = vpop.f32.mrf.mxu0
        %v1182 = vadd.f32 0.0, %v1181
        %v1183 = vpop.f32.mrf.mxu0
        %1184 = vdwg.mxu0
        %1185 = vmatpush.bf16.msra.mxu0 0
        %1186 = vmatpush.bf16.msra.mxu0 0
        %1187 = vmatpush.bf16.msra.mxu0 0
        %1188 = vmatpush.bf16.msra.mxu0 0
        %1189 = vmatpush.bf16.msra.mxu0 0
        %1190 = vmatpush.bf16.msra.mxu0 0
        %1191 = vmatpush.bf16.msra.mxu0 0
        %1192 = vmatpush.bf16.msra.mxu0 %v1170
        %1193 = vmatmul.bf16.gmra.mxu0 %v1164
        %v1194 = vpop.f32.mrf.mxu0
        %v1195 = vadd.f32 0.0, %v1194
        %v1196 = vpop.f32.mrf.mxu0
        %1197 = vdwg.mxu0
        %v1199 = vsel %vm685, %v1148, 0
        %v1202 = vsel %vm689, %v1149, 0
        %v1205 = vsel %vm689, %v1150, 0
        %1207 = vmatpush.bf16.msra.mxu0 0
        %1208 = vmatpush.bf16.msra.mxu0 0
        %1209 = vmatpush.bf16.msra.mxu0 0
        %1210 = vmatpush.bf16.msra.mxu0 0
        %1211 = vmatpush.bf16.msra.mxu0 0
        %1212 = vmatpush.bf16.msra.mxu0 0
        %1213 = vmatpush.bf16.msra.mxu0 0
        %1214 = vmatpush.bf16.msra.mxu0 %v1202
        %1215 = vmatmul.bf16.gmra.mxu0 %v1199
        %v1216 = vpop.f32.mrf.mxu0
        %v1217 = vadd.f32 %v1182, %v1216
        %v1218 = vpop.f32.mrf.mxu0
        %1219 = vdwg.mxu0
        %1220 = vmatpush.bf16.msra.mxu0 0
        %1221 = vmatpush.bf16.msra.mxu0 0
        %1222 = vmatpush.bf16.msra.mxu0 0
        %1223 = vmatpush.bf16.msra.mxu0 0
        %1224 = vmatpush.bf16.msra.mxu0 0
        %1225 = vmatpush.bf16.msra.mxu0 0
        %1226 = vmatpush.bf16.msra.mxu0 0
        %1227 = vmatpush.bf16.msra.mxu0 %v1205
        %1228 = vmatmul.bf16.gmra.mxu0 %v1199
        %v1229 = vpop.f32.mrf.mxu0
        %v1230 = vadd.f32 %v1195, %v1229
        %v1231 = vpop.f32.mrf.mxu0
        %1232 = vdwg.mxu0
        %1233 = vrot.lane.b32.xlu0 %v1138, 15
        %v1234 = vpop.permute.xlu0 %1233
        %1235 = vrot.lane.b32.xlu0 %v1139, 15
        %v1236 = vpop.permute.xlu0 %1235
        %v1237 = vsel %vm761, %v1234, %v1236
        %v1238 = vsel %vm761, %v1236, %v1234
        %v1239 = vsel %vm766, %v1238, 0.0
        %v1240 = vsel %vm767, %v1237, 0.0
        %s1241 = scalar_lea.vmem %s9, 8
        %v1242 = vld [vmem:[%s1241] sm:$0xf]
        %v1243 = vpack.c.bf16 %v1239, %v1239
        %v1244 = vpack.c.bf16 %v1240, %v1240
        %v1246 = vsel %vm685, %v1242, 0
        %v1249 = vsel %vm689, %v1243, 0
        %v1252 = vsel %vm689, %v1244, 0
        %1254 = vmatpush.bf16.msra.mxu0 0
        %1255 = vmatpush.bf16.msra.mxu0 0
        %1256 = vmatpush.bf16.msra.mxu0 0
        %1257 = vmatpush.bf16.msra.mxu0 0
        %1258 = vmatpush.bf16.msra.mxu0 0
        %1259 = vmatpush.bf16.msra.mxu0 0
        %1260 = vmatpush.bf16.msra.mxu0 0
        %1261 = vmatpush.bf16.msra.mxu0 %v1249
        %1262 = vmatmul.bf16.gmra.mxu0 %v1246
        %v1263 = vpop.f32.mrf.mxu0
        %v1264 = vadd.f32 0.0, %v1263
        %v1265 = vpop.f32.mrf.mxu0
        %1266 = vdwg.mxu0
        %1267 = vmatpush.bf16.msra.mxu0 0
        %1268 = vmatpush.bf16.msra.mxu0 0
        %1269 = vmatpush.bf16.msra.mxu0 0
        %1270 = vmatpush.bf16.msra.mxu0 0
        %1271 = vmatpush.bf16.msra.mxu0 0
        %1272 = vmatpush.bf16.msra.mxu0 0
        %1273 = vmatpush.bf16.msra.mxu0 0
        %1274 = vmatpush.bf16.msra.mxu0 %v1252
        %1275 = vmatmul.bf16.gmra.mxu0 %v1246
        %v1276 = vpop.f32.mrf.mxu0
        %v1277 = vadd.f32 0.0, %v1276
        %v1278 = vpop.f32.mrf.mxu0
        %1279 = vdwg.mxu0
        %v1280 = vadd.f32 %v1217, %v1264
        %v1281 = vadd.f32 %v1230, %v1277
        %1282 = vrot.lane.b32.xlu0 %v1138, 1
        %v1283 = vpop.permute.xlu0 %1282
        %1284 = vrot.lane.b32.xlu0 %v1139, 1
        %v1285 = vpop.permute.xlu0 %1284
        %v1286 = vsel %vm815, %v1283, %v1285
        %v1287 = vsel %vm815, %v1285, %v1283
        %v1288 = vsel %vm820, %v1287, 0.0
        %v1289 = vsel %vm821, %v1286, 0.0
        %s1290 = scalar_lea.vmem %s9, 12
        %v1291 = vld [vmem:[%s1290] sm:$0xf]
        %v1292 = vpack.c.bf16 %v1288, %v1288
        %v1293 = vpack.c.bf16 %v1289, %v1289
        %v1295 = vsel %vm685, %v1291, 0
        %v1298 = vsel %vm689, %v1292, 0
        %v1301 = vsel %vm689, %v1293, 0
        %1303 = vmatpush.bf16.msra.mxu0 0
        %1304 = vmatpush.bf16.msra.mxu0 0
        %1305 = vmatpush.bf16.msra.mxu0 0
        %1306 = vmatpush.bf16.msra.mxu0 0
        %1307 = vmatpush.bf16.msra.mxu0 0
        %1308 = vmatpush.bf16.msra.mxu0 0
        %1309 = vmatpush.bf16.msra.mxu0 0
        %1310 = vmatpush.bf16.msra.mxu0 %v1298
        %1311 = vmatmul.bf16.gmra.mxu0 %v1295
        %v1312 = vpop.f32.mrf.mxu0
        %v1313 = vadd.f32 0.0, %v1312
        %v1314 = vpop.f32.mrf.mxu0
        %1315 = vdwg.mxu0
        %1316 = vmatpush.bf16.msra.mxu0 0
        %1317 = vmatpush.bf16.msra.mxu0 0
        %1318 = vmatpush.bf16.msra.mxu0 0
        %1319 = vmatpush.bf16.msra.mxu0 0
        %1320 = vmatpush.bf16.msra.mxu0 0
        %1321 = vmatpush.bf16.msra.mxu0 0
        %1322 = vmatpush.bf16.msra.mxu0 0
        %1323 = vmatpush.bf16.msra.mxu0 %v1301
        %1324 = vmatmul.bf16.gmra.mxu0 %v1295
        %v1325 = vpop.f32.mrf.mxu0
        %v1326 = vadd.f32 0.0, %v1325
        %v1327 = vpop.f32.mrf.mxu0
        %1328 = vdwg.mxu0
        %v1329 = vadd.f32 %v1280, %v1313
        %v1330 = vadd.f32 %v1281, %v1326
        %s1331 = scalar_lea.vmem %s9, 16
        %v1332 = vld [vmem:[%s1331] sm:$0xf]
        %v1333 = vpack.c.bf16 %v1138, %v1138
        %v1334 = vpack.c.bf16 %v1139, %v1139
        %v1336 = vsel %vm685, %v1332, 0
        %v1339 = vsel %vm689, %v1333, 0
        %v1342 = vsel %vm689, %v1334, 0
        %1344 = vmatpush.bf16.msra.mxu0 0
        %1345 = vmatpush.bf16.msra.mxu0 0
        %1346 = vmatpush.bf16.msra.mxu0 0
        %1347 = vmatpush.bf16.msra.mxu0 0
        %1348 = vmatpush.bf16.msra.mxu0 0
        %1349 = vmatpush.bf16.msra.mxu0 0
        %1350 = vmatpush.bf16.msra.mxu0 0
        %1351 = vmatpush.bf16.msra.mxu0 %v1339
        %1352 = vmatmul.bf16.gmra.mxu0 %v1336
        %v1353 = vpop.f32.mrf.mxu0
        %v1354 = vadd.f32 0.0, %v1353
        %v1355 = vpop.f32.mrf.mxu0
        %1356 = vdwg.mxu0
        %1357 = vmatpush.bf16.msra.mxu0 0
        %1358 = vmatpush.bf16.msra.mxu0 0
        %1359 = vmatpush.bf16.msra.mxu0 0
        %1360 = vmatpush.bf16.msra.mxu0 0
        %1361 = vmatpush.bf16.msra.mxu0 0
        %1362 = vmatpush.bf16.msra.mxu0 0
        %1363 = vmatpush.bf16.msra.mxu0 0
        %1364 = vmatpush.bf16.msra.mxu0 %v1342
        %1365 = vmatmul.bf16.gmra.mxu0 %v1336
        %v1366 = vpop.f32.mrf.mxu0
        %v1367 = vadd.f32 0.0, %v1366
        %v1368 = vpop.f32.mrf.mxu0
        %1369 = vdwg.mxu0
        %v1370 = vadd.f32 %v1329, %v1354
        %v1371 = vadd.f32 %v1330, %v1367
        %1372 = vrot.lane.b32.xlu0 %v1138, 127
        %v1373 = vpop.permute.xlu0 %1372
        %1374 = vrot.lane.b32.xlu0 %v1139, 127
        %v1375 = vpop.permute.xlu0 %1374
        %v1376 = vsel %vm910, %v1373, %v1375
        %v1377 = vsel %vm910, %v1375, %v1373
        %v1378 = vsel %vm915, %v1376, 0.0
        %v1379 = vsel %vm916, %v1377, 0.0
        %s1380 = scalar_lea.vmem %s9, 20
        %v1381 = vld [vmem:[%s1380] sm:$0xf]
        %v1382 = vpack.c.bf16 %v1378, %v1378
        %v1383 = vpack.c.bf16 %v1379, %v1379
        %v1385 = vsel %vm685, %v1381, 0
        %v1388 = vsel %vm689, %v1382, 0
        %v1391 = vsel %vm689, %v1383, 0
        %1393 = vmatpush.bf16.msra.mxu0 0
        %1394 = vmatpush.bf16.msra.mxu0 0
        %1395 = vmatpush.bf16.msra.mxu0 0
        %1396 = vmatpush.bf16.msra.mxu0 0
        %1397 = vmatpush.bf16.msra.mxu0 0
        %1398 = vmatpush.bf16.msra.mxu0 0
        %1399 = vmatpush.bf16.msra.mxu0 0
        %1400 = vmatpush.bf16.msra.mxu0 %v1388
        %1401 = vmatmul.bf16.gmra.mxu0 %v1385
        %v1402 = vpop.f32.mrf.mxu0
        %v1403 = vadd.f32 0.0, %v1402
        %v1404 = vpop.f32.mrf.mxu0
        %1405 = vdwg.mxu0
        %1406 = vmatpush.bf16.msra.mxu0 0
        %1407 = vmatpush.bf16.msra.mxu0 0
        %1408 = vmatpush.bf16.msra.mxu0 0
        %1409 = vmatpush.bf16.msra.mxu0 0
        %1410 = vmatpush.bf16.msra.mxu0 0
        %1411 = vmatpush.bf16.msra.mxu0 0
        %1412 = vmatpush.bf16.msra.mxu0 0
        %1413 = vmatpush.bf16.msra.mxu0 %v1391
        %1414 = vmatmul.bf16.gmra.mxu0 %v1385
        %v1415 = vpop.f32.mrf.mxu0
        %v1416 = vadd.f32 0.0, %v1415
        %v1417 = vpop.f32.mrf.mxu0
        %1418 = vdwg.mxu0
        %v1419 = vadd.f32 %v1370, %v1403
        %v1420 = vadd.f32 %v1371, %v1416
        %1421 = vrot.lane.b32.xlu0 %v1138, 113
        %v1422 = vpop.permute.xlu0 %1421
        %1423 = vrot.lane.b32.xlu0 %v1139, 113
        %v1424 = vpop.permute.xlu0 %1423
        %v1425 = vsel %vm964, %v1422, %v1424
        %v1426 = vsel %vm964, %v1424, %v1422
        %v1427 = vsel %vm969, %v1425, 0.0
        %v1428 = vsel %vm970, %v1426, 0.0
        %s1429 = scalar_lea.vmem %s9, 24
        %v1430 = vld [vmem:[%s1429] sm:$0xf]
        %v1431 = vpack.c.bf16 %v1427, %v1427
        %v1432 = vpack.c.bf16 %v1428, %v1428
        %v1434 = vsel %vm685, %v1430, 0
        %v1437 = vsel %vm689, %v1431, 0
        %v1440 = vsel %vm689, %v1432, 0
        %1442 = vmatpush.bf16.msra.mxu0 0
        %1443 = vmatpush.bf16.msra.mxu0 0
        %1444 = vmatpush.bf16.msra.mxu0 0
        %1445 = vmatpush.bf16.msra.mxu0 0
        %1446 = vmatpush.bf16.msra.mxu0 0
        %1447 = vmatpush.bf16.msra.mxu0 0
        %1448 = vmatpush.bf16.msra.mxu0 0
        %1449 = vmatpush.bf16.msra.mxu0 %v1437
        %1450 = vmatmul.bf16.gmra.mxu0 %v1434
        %v1451 = vpop.f32.mrf.mxu0
        %v1452 = vadd.f32 0.0, %v1451
        %v1453 = vpop.f32.mrf.mxu0
        %1454 = vdwg.mxu0
        %1455 = vmatpush.bf16.msra.mxu0 0
        %1456 = vmatpush.bf16.msra.mxu0 0
        %1457 = vmatpush.bf16.msra.mxu0 0
        %1458 = vmatpush.bf16.msra.mxu0 0
        %1459 = vmatpush.bf16.msra.mxu0 0
        %1460 = vmatpush.bf16.msra.mxu0 0
        %1461 = vmatpush.bf16.msra.mxu0 0
        %1462 = vmatpush.bf16.msra.mxu0 %v1440
        %1463 = vmatmul.bf16.gmra.mxu0 %v1434
        %v1464 = vpop.f32.mrf.mxu0
        %v1465 = vadd.f32 0.0, %v1464
        %v1466 = vpop.f32.mrf.mxu0
        %1467 = vdwg.mxu0
        %v1468 = vadd.f32 %v1419, %v1452
        %v1469 = vadd.f32 %v1420, %v1465
        %1470 = vrot.lane.b32.xlu0 %v1138, 112
        %v1471 = vpop.permute.xlu0 %1470
        %1472 = vrot.lane.b32.xlu0 %v1139, 112
        %v1473 = vpop.permute.xlu0 %1472
        %v1474 = vsel %vm1018, %v1471, %v1473
        %v1475 = vsel %vm1018, %v1473, %v1471
        %v1476 = vsel %vm1023, %v1474, 0.0
        %v1477 = vsel %vm1024, %v1475, 0.0
        %s1478 = scalar_lea.vmem %s9, 28
        %v1479 = vld [vmem:[%s1478] sm:$0xf]
        %v1480 = vpack.c.bf16 %v1476, %v1476
        %v1481 = vpack.c.bf16 %v1477, %v1477
        %v1483 = vsel %vm685, %v1479, 0
        %v1486 = vsel %vm689, %v1480, 0
        %v1489 = vsel %vm689, %v1481, 0
        %1491 = vmatpush.bf16.msra.mxu0 0
        %1492 = vmatpush.bf16.msra.mxu0 0
        %1493 = vmatpush.bf16.msra.mxu0 0
        %1494 = vmatpush.bf16.msra.mxu0 0
        %1495 = vmatpush.bf16.msra.mxu0 0
        %1496 = vmatpush.bf16.msra.mxu0 0
        %1497 = vmatpush.bf16.msra.mxu0 0
        %1498 = vmatpush.bf16.msra.mxu0 %v1486
        %1499 = vmatmul.bf16.gmra.mxu0 %v1483
        %v1500 = vpop.f32.mrf.mxu0
        %v1501 = vadd.f32 0.0, %v1500
        %v1502 = vpop.f32.mrf.mxu0
        %1503 = vdwg.mxu0
        %1504 = vmatpush.bf16.msra.mxu0 0
        %1505 = vmatpush.bf16.msra.mxu0 0
        %1506 = vmatpush.bf16.msra.mxu0 0
        %1507 = vmatpush.bf16.msra.mxu0 0
        %1508 = vmatpush.bf16.msra.mxu0 0
        %1509 = vmatpush.bf16.msra.mxu0 0
        %1510 = vmatpush.bf16.msra.mxu0 0
        %1511 = vmatpush.bf16.msra.mxu0 %v1489
        %1512 = vmatmul.bf16.gmra.mxu0 %v1483
        %v1513 = vpop.f32.mrf.mxu0
        %v1514 = vadd.f32 0.0, %v1513
        %v1515 = vpop.f32.mrf.mxu0
        %1516 = vdwg.mxu0
        %v1517 = vadd.f32 %v1468, %v1501
        %v1518 = vadd.f32 %v1469, %v1514
        %1519 = vrot.lane.b32.xlu0 %v1138, 111
        %v1520 = vpop.permute.xlu0 %1519
        %1521 = vrot.lane.b32.xlu0 %v1139, 111
        %v1522 = vpop.permute.xlu0 %1521
        %v1523 = vsel %vm1072, %v1520, %v1522
        %v1524 = vsel %vm1072, %v1522, %v1520
        %v1525 = vsel %vm1077, %v1523, 0.0
        %v1526 = vsel %vm1078, %v1524, 0.0
        %s1527 = scalar_lea.vmem %s9, 32
        %v1528 = vld [vmem:[%s1527] sm:$0xf]
        %v1529 = vpack.c.bf16 %v1525, %v1525
        %v1530 = vpack.c.bf16 %v1526, %v1526
        %v1532 = vsel %vm685, %v1528, 0
        %v1535 = vsel %vm689, %v1529, 0
        %v1538 = vsel %vm689, %v1530, 0
        %1540 = vmatpush.bf16.msra.mxu0 0
        %1541 = vmatpush.bf16.msra.mxu0 0
        %1542 = vmatpush.bf16.msra.mxu0 0
        %1543 = vmatpush.bf16.msra.mxu0 0
        %1544 = vmatpush.bf16.msra.mxu0 0
        %1545 = vmatpush.bf16.msra.mxu0 0
        %1546 = vmatpush.bf16.msra.mxu0 0
        %1547 = vmatpush.bf16.msra.mxu0 %v1535
        %1548 = vmatmul.bf16.gmra.mxu0 %v1532
        %v1549 = vpop.f32.mrf.mxu0
        %v1550 = vadd.f32 0.0, %v1549
        %v1551 = vpop.f32.mrf.mxu0
        %1552 = vdwg.mxu0
        %1553 = vmatpush.bf16.msra.mxu0 0
        %1554 = vmatpush.bf16.msra.mxu0 0
        %1555 = vmatpush.bf16.msra.mxu0 0
        %1556 = vmatpush.bf16.msra.mxu0 0
        %1557 = vmatpush.bf16.msra.mxu0 0
        %1558 = vmatpush.bf16.msra.mxu0 0
        %1559 = vmatpush.bf16.msra.mxu0 0
        %1560 = vmatpush.bf16.msra.mxu0 %v1538
        %1561 = vmatmul.bf16.gmra.mxu0 %v1532
        %v1562 = vpop.f32.mrf.mxu0
        %v1563 = vadd.f32 0.0, %v1562
        %v1564 = vpop.f32.mrf.mxu0
        %1565 = vdwg.mxu0
        %v1566 = vadd.f32 %v1517, %v1550
        %v1567 = vadd.f32 %v1518, %v1563
        %v1568 = vld [vmem:[%s10] sm:$0xff]
        %1570 = vset.pattern.permute.xlu0 0
        %1571 = vperm.xlu0 %1570, %v1568
        %v1572 = vpop.permute.xlu0 %1571
        %v1574 = vadd.f32 %v1566, %v1572
        %v1575 = vadd.f32 %v1567, %v1572
        %v1576 = vmul.f32 %v1574, 0.5
        %v1577 = vmul.f32 %v1575, 0.5
        %v1578 = vtanh.pop %v1576
        %v1579 = vtanh.pop %v1577
        %v1580 = vmul.f32 %v1578, 0.5
        %v1581 = vmul.f32 %v1579, 0.5
        %v1582 = vadd.f32 %v1580, 0.5
        %v1583 = vadd.f32 %v1581, 0.5
        %v1584 = vmul.f32 %v1574, %v1582
        %v1585 = vmul.f32 %v1575, %v1583
        %v1586 = vadd.f32 %v605, %v1584
        %v1587 = vadd.f32 %v606, %v1585
        %v1588 = vld [vmem:[%s11] sm:$0xf]
        %v1589 = vld [vmem:[%s11 + $0x4] sm:$0xf]
        %v1590 = vpack.c.bf16 %v1586, %v1586
        %v1591 = vpack.c.bf16 %v1587, %v1587
        %v1592 = vld [vmem:[%s12] sm:$0xf]
        %v1593 = vld [vmem:[%s12 + $0x4] sm:$0xf]
        %v1594 = vpack.c.bf16 %v607, %v607
        %v1595 = vpack.c.bf16 %v608, %v608
        %v1598 = vunpack.c.l.b16 %v1592
        %v1599 = vunpack.c.l.b16 %v1593
        %v1600 = vpack.c.b16 %v1599, %v1598
        %v1602 = vsel %vm685, %v1600, 0
        %v1605 = vsel %vm689, %v1594, 0
        %v1608 = vsel %vm689, %v1595, 0
        %1610 = vmatpush.bf16.msra.mxu0 0
        %1611 = vmatpush.bf16.msra.mxu0 0
        %1612 = vmatpush.bf16.msra.mxu0 0
        %1613 = vmatpush.bf16.msra.mxu0 0
        %1614 = vmatpush.bf16.msra.mxu0 0
        %1615 = vmatpush.bf16.msra.mxu0 0
        %1616 = vmatpush.bf16.msra.mxu0 0
        %1617 = vmatpush.bf16.msra.mxu0 %v1605
        %1618 = vmatmul.bf16.gmra.mxu0 %v1602
        %v1619 = vpop.f32.mrf.mxu0
        %v1620 = vadd.f32 0.0, %v1619
        %v1621 = vpop.f32.mrf.mxu0
        %v1622 = vadd.f32 0.0, %v1621
        %1623 = vdwg.mxu0
        %1624 = vmatpush.bf16.msra.mxu0 0
        %1625 = vmatpush.bf16.msra.mxu0 0
        %1626 = vmatpush.bf16.msra.mxu0 0
        %1627 = vmatpush.bf16.msra.mxu0 0
        %1628 = vmatpush.bf16.msra.mxu0 0
        %1629 = vmatpush.bf16.msra.mxu0 0
        %1630 = vmatpush.bf16.msra.mxu0 0
        %1631 = vmatpush.bf16.msra.mxu0 %v1608
        %1632 = vmatmul.bf16.gmra.mxu0 %v1602
        %v1633 = vpop.f32.mrf.mxu0
        %v1634 = vadd.f32 0.0, %v1633
        %v1635 = vpop.f32.mrf.mxu0
        %v1636 = vadd.f32 0.0, %v1635
        %1637 = vdwg.mxu0
        %v1640 = vunpack.c.l.b16 %v1588
        %v1641 = vunpack.c.l.b16 %v1589
        %v1642 = vpack.c.b16 %v1641, %v1640
        %v1644 = vsel %vm685, %v1642, 0
        %v1647 = vsel %vm689, %v1590, 0
        %v1650 = vsel %vm689, %v1591, 0
        %1652 = vmatpush.bf16.msra.mxu0 0
        %1653 = vmatpush.bf16.msra.mxu0 0
        %1654 = vmatpush.bf16.msra.mxu0 0
        %1655 = vmatpush.bf16.msra.mxu0 0
        %1656 = vmatpush.bf16.msra.mxu0 0
        %1657 = vmatpush.bf16.msra.mxu0 0
        %1658 = vmatpush.bf16.msra.mxu0 0
        %1659 = vmatpush.bf16.msra.mxu0 %v1647
        %1660 = vmatmul.bf16.gmra.mxu0 %v1644
        %v1661 = vpop.f32.mrf.mxu0
        %v1662 = vadd.f32 %v1620, %v1661
        %v1663 = vpop.f32.mrf.mxu0
        %v1664 = vadd.f32 %v1622, %v1663
        %1665 = vdwg.mxu0
        %1666 = vmatpush.bf16.msra.mxu0 0
        %1667 = vmatpush.bf16.msra.mxu0 0
        %1668 = vmatpush.bf16.msra.mxu0 0
        %1669 = vmatpush.bf16.msra.mxu0 0
        %1670 = vmatpush.bf16.msra.mxu0 0
        %1671 = vmatpush.bf16.msra.mxu0 0
        %1672 = vmatpush.bf16.msra.mxu0 0
        %1673 = vmatpush.bf16.msra.mxu0 %v1650
        %1674 = vmatmul.bf16.gmra.mxu0 %v1644
        %v1675 = vpop.f32.mrf.mxu0
        %v1676 = vadd.f32 %v1634, %v1675
        %v1677 = vpop.f32.mrf.mxu0
        %v1678 = vadd.f32 %v1636, %v1677
        %1679 = vdwg.mxu0
        %v1680 = vld [vmem:[%s13] sm:$0xff]
        %v1681 = vld [vmem:[%s13 + $0x8] sm:$0xff]
        %1683 = vset.pattern.permute.xlu0 0
        %1684 = vperm.xlu0 %1683, %v1680
        %v1685 = vpop.permute.xlu0 %1684
        %1688 = vset.pattern.permute.xlu0 0
        %1689 = vperm.xlu0 %1688, %v1681
        %v1690 = vpop.permute.xlu0 %1689
        %v1692 = vadd.f32 %v1662, %v1685
        %v1693 = vadd.f32 %v1676, %v1685
        %v1694 = vadd.f32 %v1664, %v1690
        %v1695 = vadd.f32 %v1678, %v1690
        %v1696 = vmul.f32 %v1692, 0.5
        %v1697 = vmul.f32 %v1693, 0.5
        %v1698 = vmul.f32 %v1694, 0.5
        %v1699 = vmul.f32 %v1695, 0.5
        %v1700 = vtanh.pop %v1696
        %v1701 = vtanh.pop %v1697
        %v1702 = vtanh.pop %v1698
        %v1703 = vtanh.pop %v1699
        %v1704 = vmul.f32 %v1700, 0.5
        %v1705 = vmul.f32 %v1701, 0.5
        %v1706 = vmul.f32 %v1702, 0.5
        %v1707 = vmul.f32 %v1703, 0.5
        %v1708 = vadd.f32 %v1704, 0.5
        %v1709 = vadd.f32 %v1705, 0.5
        %v1710 = vadd.f32 %v1706, 0.5
        %v1711 = vadd.f32 %v1707, 0.5
        %v1712 = vmul.f32 %v1692, %v1708
        %v1713 = vmul.f32 %v1693, %v1709
        %v1714 = vmul.f32 %v1694, %v1710
        %v1715 = vmul.f32 %v1695, %v1711
        %1716 = vst [vmem:[%s460] sm:$0xff] %v1712
        %1717 = vst [vmem:[%s460 + $0x8] sm:$0xff] %v1713
        %1718 = vst [vmem:[%s460 + $0x10] sm:$0xff] %v1714
        %1719 = vst [vmem:[%s460 + $0x18] sm:$0xff] %v1715
        %s1720 = sand.u32 %s335, 1
        %s1721 = scalar_lea.sflag [#allocation3], %s1720
        %s1722 = sand.u32 %s335, 1
        %s1723 = smul.addr %s1722, 32
        %s1724 = scalar_lea.vmem [#allocation2], %s1723
        // Predicated region
        $region77: #{tpu_custom_call.1} parent=75 // pred_check
          %p1725 = pneg %p345
        $region78: #{tpu_custom_call.1} parent=75 // pred_check_branch
          %1727 = sbr.rel (%p1725) target = $region80
        $region79: #{tpu_custom_call.1} parent=75 // pred_region
          %1729 = vsyncadd %s1721, 0
          %s1730 = smul.addr %s28, 4
          %s1731 = smul.addr %s1730, 8
          %s1732 = scalar_lea.hbm %s14, %s1731
          %s1733 = sshll.u32 %s1724, 4
          %s1734 = int_to_ptr.vmem [resolvable:$true] %s1733
          %s1735 = sshll.u32 %s1732, 4
          %s1736 = int_to_ptr.hbm [resolvable:$true] %s1735
          %1741 = dma.vmem_to_hbm [thread:$0]  %s1734, 512, %s1736, %s1721, 256, 256, 16
        $region80: #{tpu_custom_call.1} parent=75 // pred_fallthru
          _
      $region76: #{tpu_custom_call.1} parent=5 // pred_fallthru
        _
      %p1742 = scmp.le.s32.totalorder 2, %s23
      // Predicated region
      $region81: #{tpu_custom_call.1} parent=5 // pred_check
        %p1743 = pneg %p1742
      $region82: #{tpu_custom_call.1} parent=5 // pred_check_branch
        %1745 = sbr.rel (%p1743) target = $region84
      $region83: #{tpu_custom_call.1} parent=5 // pred_region
        %s1746 = ssub.s32 %s23, 2
        // Predicated region
        $region85: #{tpu_custom_call.1} parent=83 // pred_check
          %p1747 = pneg %p351
        $region86: #{tpu_custom_call.1} parent=83 // pred_check_branch
          %1749 = sbr.rel (%p1747) target = $region88
        $region87: #{tpu_custom_call.1} parent=83 // pred_region
          %s1750 = sand.u32 %s336, 1
          %s1751 = scalar_lea.sflag [#allocation3], %s1750
          %s1752 = sand.u32 %s336, 1
          %s1753 = smul.addr %s1752, 32
          %s1754 = scalar_lea.vmem [#allocation2], %s1753
          %1756 = dma.done %s1751, 512
        $region88: #{tpu_custom_call.1} parent=83 // pred_fallthru
          _
      $region84: #{tpu_custom_call.1} parent=5 // pred_fallthru
        _
    $region6: #{tpu_custom_call.1} parent=1 // loop_footer
      %s27 = sadd.s32 1, %s23
    $region7: #{tpu_custom_call.1} parent=1 // loop_footer_branch
      %22 = sbr.rel target = $region3
    $region8: #{tpu_custom_call.1} parent=1 // loop_exit
      _
    %1757 = vsyncpa [#allocation3], 1
    %s1758 = scalar_lea.sflag [#allocation3], 1
    %1759 = vsyncpa %s1758, 1

</llo_original>
